<compile_context>
chip_gen: v7x
topology: tpu7x:2x2x1
jax: 0.10.0
libtpu: 0.0.40
codegen_flags: <defaults>
</compile_context>

<pallas_src>
import functools

import jax
import jax.numpy as jnp
from jax.experimental import pallas as pl
from jax.experimental.pallas import tpu as pltpu


def xyz_net2_kernel(xT_ref,
                    w1_ref, b1_ref,
                    w2_ref, b2_ref,
                    w3_ref, b3_ref,
                    w4_ref, b4_ref,
                    o_ref):
    """Feature-major MLP.  Weights/biases are pre-folded (see fold_params) so
    every hidden activation is a plain tanh and the final sigmoid is
    0.5*tanh(.)+0.5 on the 1-row output."""
    xT = xT_ref[...]                                                  # (3, tB) f32

    # Layer 1: 3 -> 128 (tiny K, f32 MXU)
    z1 = jnp.dot(w1_ref[...], xT,
                 preferred_element_type=jnp.float32) + b1_ref[...]    # (128, tB)
    t1 = jnp.tanh(z1.astype(jnp.bfloat16))                            # bf16 EUP on v6e/v7x

    # Layer 2: 128 -> 768 (dominant FLOPs; bf16 MXU, f32 accumulate)
    z2 = jnp.dot(w2_ref[...], t1,
                 preferred_element_type=jnp.float32) + b2_ref[...]    # (768, tB)
    t2 = jnp.tanh(z2.astype(jnp.bfloat16))

    # Layer 3: 768 -> 10 (bf16 MXU, f32 accumulate)
    z3 = jnp.dot(w3_ref[...], t2,
                 preferred_element_type=jnp.float32) + b3_ref[...]    # (10, tB)
    t3 = jnp.tanh(z3)                                                 # small, f32

    # Layer 4: 10 -> 1 (tiny, f32)
    z4 = jnp.dot(w4_ref[...], t3,
                 preferred_element_type=jnp.float32) + b4_ref[...]    # (1, tB)

    # Remaining half of the tanh-form sigmoid, applied only on the 1-row output.
    o_ref[...] = 0.5 * jnp.tanh(z4) + 0.5


def _round_up(n, m):
    return ((n + m - 1) // m) * m


@functools.partial(jax.jit, static_argnames=("tile_b",))
def xyz_net2_forward(x, fparams, *, tile_b=2048):
    """x: (B, 3) float32.  fparams: output of fold_params (kernel layout)."""
    B = x.shape[0]
    # tile_b must be a multiple of 128 (lane dim of the x / out blocks); cap it
    # so small batches stay a single grid step.
    tile_b = max(128, _round_up(min(tile_b, _round_up(B, 128)), 128))
    Bp = _round_up(B, tile_b)

    # Feature-major, lane-dense input: one tiny transpose + pad in the wrapper.
    xT = jnp.pad(x.astype(jnp.float32).T, ((0, 0), (0, Bp - B)))      # (3, Bp)

    w1, b1 = fparams["w1"], fparams["b1"]
    w2, b2 = fparams["w2"], fparams["b2"]
    w3, b3 = fparams["w3"], fparams["b3"]
    w4, b4 = fparams["w4"], fparams["b4"]

    def resident(arr):
        # Constant block index across the batch grid -> stays VMEM resident,
        # no re-DMA as the grid advances.
        return pl.BlockSpec(arr.shape, lambda i: (0, 0), memory_space=pltpu.VMEM)

    in_specs = [
        pl.BlockSpec((3, tile_b), lambda i: (0, i), memory_space=pltpu.VMEM),
        resident(w1), resident(b1),
        resident(w2), resident(b2),
        resident(w3), resident(b3),
        resident(w4), resident(b4),
    ]
    out_spec = pl.BlockSpec((1, tile_b), lambda i: (0, i), memory_space=pltpu.VMEM)

    out = pl.pallas_call(
        xyz_net2_kernel,
        grid=(Bp // tile_b,),
        out_shape=jax.ShapeDtypeStruct((1, Bp), jnp.float32),
        in_specs=in_specs,
        out_specs=out_spec,
        compiler_params=pltpu.CompilerParams(
            # Batch tiles are independent -> shard across v7x's 2 TensorCores.
            dimension_semantics=("parallel",),
            # (768, tile_b) intermediates at tile_b=2048 need ~12-14 MiB; raise
            # the scoped limit past v5e's 16 MiB default, stay < v7x physical.
            vmem_limit_bytes=48 * 1024 * 1024,
        ),
    )(xT, w1, b1, w2, b2, w3, b3, w4, b4)

    # Drop batch padding; back to (B, 1).
    return out[0, :B].reshape(B, 1)


def init_params(key):
    """PyTorch-layout params: W_i (out, in), b_i (out,), nn.Linear default init."""
    dims = [(3, 128), (128, 768), (768, 10), (10, 1)]
    params = {}
    keys = jax.random.split(key, 2 * len(dims))
    for i, (fan_in, fan_out) in enumerate(dims):
        bound = 1.0 / (fan_in ** 0.5)
        params[f"w{i + 1}"] = jax.random.uniform(
            keys[2 * i], (fan_out, fan_in), minval=-bound, maxval=bound,
            dtype=jnp.float32)
        params[f"b{i + 1}"] = jax.random.uniform(
            keys[2 * i + 1], (fan_out,), minval=-bound, maxval=bound,
            dtype=jnp.float32)
    return params


def fold_params(params):
    """One-time host-side fold of sigmoid(z) = 0.5*tanh(0.5*z) + 0.5 into the
    weights/biases (kernel layout, feature-major):

      layer 1:   t1 = tanh(0.5*W1 @ x + 0.5*b1)
      layer i>1: t_i = tanh(0.25*W_i @ t_{i-1} + 0.25*rowsum(W_i) + 0.5*b_i)
      output:    y  = 0.5*t4 + 0.5

    W2/W3 (the FLOP-dominant layers) are stored bf16 (the 0.25 scale is a
    power of two, so no extra rounding from the fold itself)."""
    w1 = params["w1"].astype(jnp.float32)
    b1 = params["b1"].astype(jnp.float32)
    folded = {
        "w1": 0.5 * w1,                          # (128, 3)
        "b1": (0.5 * b1)[:, None],               # (128, 1)
    }
    for i in (2, 3, 4):
        w = params[f"w{i}"].astype(jnp.float32)  # (out, in)
        b = params[f"b{i}"].astype(jnp.float32)  # (out,)
        folded[f"w{i}"] = 0.25 * w
        folded[f"b{i}"] = (0.25 * jnp.sum(w, axis=1) + 0.5 * b)[:, None]
    folded["w2"] = folded["w2"].astype(jnp.bfloat16)   # (768, 128)
    folded["w3"] = folded["w3"].astype(jnp.bfloat16)   # (10, 768)
    return folded


def reference_forward(x, params):
    """Pure-JAX f32 reference matching the PyTorch module (eval mode)."""
    h = x
    for i in range(1, 5):
        h = jax.nn.sigmoid(h @ params[f"w{i}"].T + params[f"b{i}"])
    return h


if __name__ == "__main__":
    key = jax.random.PRNGKey(0)
    k_param, k_x = jax.random.split(key)
    params = init_params(k_param)
    fparams = fold_params(params)

    # Small but non-trivial batch: exercises the batch grid (2 tiles of 256)
    # and the pad-to-tile path (300 -> 512).
    B = 300
    x = jax.random.normal(k_x, (B, 3), dtype=jnp.float32)

    out = xyz_net2_forward(x, fparams, tile_b=256)
    out = jax.block_until_ready(out)

    ref = reference_forward(x, params)
    assert out.shape == (B, 1)
    # bf16 matmuls + bf16 tanh on the wide layers vs. full-f32 reference:
    # observed error is ~1e-3; 1e-2 tolerance still catches real bugs
    # (e.g. a wrong bias fold shifts outputs by >5e-2).
    max_err = jnp.max(jnp.abs(out - ref))
    assert jnp.allclose(out, ref, atol=1e-2, rtol=1e-2), (
        f"mismatch vs reference, max abs err = {max_err}")
    print("KERNEL_OK")
</pallas_src>

<mosaic_0001>
module attributes {stable_mosaic.version = 11 : i64} {
  func.func @xyz_net2_kernel(%arg0: i32, %arg1: memref<3x256xf32, #tpu.memory_space<vmem>>, %arg2: memref<128x3xf32, #tpu.memory_space<vmem>>, %arg3: memref<128x1xf32, #tpu.memory_space<vmem>>, %arg4: memref<768x128xbf16, #tpu.memory_space<vmem>>, %arg5: memref<768x1xf32, #tpu.memory_space<vmem>>, %arg6: memref<10x768xbf16, #tpu.memory_space<vmem>>, %arg7: memref<10x1xf32, #tpu.memory_space<vmem>>, %arg8: memref<1x10xf32, #tpu.memory_space<vmem>>, %arg9: memref<1x1xf32, #tpu.memory_space<vmem>>, %arg10: memref<1x256xf32, #tpu.memory_space<vmem>>) attributes {dimension_semantics = [#tpu.dimension_semantics<parallel>], iteration_bounds = array<i64: 2>, scalar_prefetch = 0 : i64, scratch_operands = 0 : i64, tpu.core_type = #tpu.core_type<tc>, window_params = [{transform_indices = @transform_0, window_bounds = array<i64: 3, 256>}, {pipeline_mode = #tpu.pipeline_mode<synchronous>, transform_indices = @transform_1, window_bounds = array<i64: 128, 3>}, {pipeline_mode = #tpu.pipeline_mode<synchronous>, transform_indices = @transform_2, window_bounds = array<i64: 128, 1>}, {pipeline_mode = #tpu.pipeline_mode<synchronous>, transform_indices = @transform_3, window_bounds = array<i64: 768, 128>}, {pipeline_mode = #tpu.pipeline_mode<synchronous>, transform_indices = @transform_4, window_bounds = array<i64: 768, 1>}, {pipeline_mode = #tpu.pipeline_mode<synchronous>, transform_indices = @transform_5, window_bounds = array<i64: 10, 768>}, {pipeline_mode = #tpu.pipeline_mode<synchronous>, transform_indices = @transform_6, window_bounds = array<i64: 10, 1>}, {pipeline_mode = #tpu.pipeline_mode<synchronous>, transform_indices = @transform_7, window_bounds = array<i64: 1, 10>}, {pipeline_mode = #tpu.pipeline_mode<synchronous>, transform_indices = @transform_8, window_bounds = array<i64: 1, 1>}, {transform_indices = @transform_9, window_bounds = array<i64: 1, 256>}]} {
    %c0 = arith.constant 0 : index
    %c0_0 = arith.constant 0 : index
    %0 = vector.load %arg1[%c0, %c0_0] : memref<3x256xf32, #tpu.memory_space<vmem>>, vector<3x256xf32>
    %c0_1 = arith.constant 0 : index
    %c0_2 = arith.constant 0 : index
    %1 = vector.load %arg2[%c0_1, %c0_2] : memref<128x3xf32, #tpu.memory_space<vmem>>, vector<128x3xf32>
    %cst = arith.constant dense<0.000000e+00> : vector<128x256xf32>
    %2 = tpu.matmul %1, %0, %cst {dimension_numbers = #tpu.dot_dimension_numbers<[1], [0], [0], [1], [0, 0, 1, 1], [], []>} : vector<128x3xf32>, vector<3x256xf32>, vector<128x256xf32> -> vector<128x256xf32>
    %c0_3 = arith.constant 0 : index
    %c0_4 = arith.constant 0 : index
    %3 = vector.load %arg3[%c0_3, %c0_4] : memref<128x1xf32, #tpu.memory_space<vmem>>, vector<128x1xf32>
    %4 = vector.broadcast %3 : vector<128x1xf32> to vector<128x256xf32>
    %5 = arith.addf %2, %4 : vector<128x256xf32>
    %6 = arith.truncf %5 : vector<128x256xf32> to vector<128x256xbf16>
    %7 = math.tanh %6 : vector<128x256xbf16>
    %c0_5 = arith.constant 0 : index
    %c0_6 = arith.constant 0 : index
    %8 = vector.load %arg4[%c0_5, %c0_6] : memref<768x128xbf16, #tpu.memory_space<vmem>>, vector<768x128xbf16>
    %cst_7 = arith.constant dense<0.000000e+00> : vector<768x256xf32>
    %9 = tpu.matmul %8, %7, %cst_7 {dimension_numbers = #tpu.dot_dimension_numbers<[1], [0], [0], [1], [0, 0, 1, 1], [], []>} : vector<768x128xbf16>, vector<128x256xbf16>, vector<768x256xf32> -> vector<768x256xf32>
    %c0_8 = arith.constant 0 : index
    %c0_9 = arith.constant 0 : index
    %10 = vector.load %arg5[%c0_8, %c0_9] : memref<768x1xf32, #tpu.memory_space<vmem>>, vector<768x1xf32>
    %11 = vector.broadcast %10 : vector<768x1xf32> to vector<768x256xf32>
    %12 = arith.addf %9, %11 : vector<768x256xf32>
    %13 = arith.truncf %12 : vector<768x256xf32> to vector<768x256xbf16>
    %14 = math.tanh %13 : vector<768x256xbf16>
    %c0_10 = arith.constant 0 : index
    %c0_11 = arith.constant 0 : index
    %15 = vector.load %arg6[%c0_10, %c0_11] : memref<10x768xbf16, #tpu.memory_space<vmem>>, vector<10x768xbf16>
    %cst_12 = arith.constant dense<0.000000e+00> : vector<10x256xf32>
    %16 = tpu.matmul %15, %14, %cst_12 {dimension_numbers = #tpu.dot_dimension_numbers<[1], [0], [0], [1], [0, 0, 1, 1], [], []>} : vector<10x768xbf16>, vector<768x256xbf16>, vector<10x256xf32> -> vector<10x256xf32>
    %c0_13 = arith.constant 0 : index
    %c0_14 = arith.constant 0 : index
    %17 = vector.load %arg7[%c0_13, %c0_14] : memref<10x1xf32, #tpu.memory_space<vmem>>, vector<10x1xf32>
    %18 = vector.broadcast %17 : vector<10x1xf32> to vector<10x256xf32>
    %19 = arith.addf %16, %18 : vector<10x256xf32>
    %20 = math.tanh %19 : vector<10x256xf32>
    %c0_15 = arith.constant 0 : index
    %c0_16 = arith.constant 0 : index
    %21 = vector.load %arg8[%c0_15, %c0_16] : memref<1x10xf32, #tpu.memory_space<vmem>>, vector<1x10xf32>
    %cst_17 = arith.constant dense<0.000000e+00> : vector<1x256xf32>
    %22 = tpu.matmul %21, %20, %cst_17 {dimension_numbers = #tpu.dot_dimension_numbers<[1], [0], [0], [1], [0, 0, 1, 1], [], []>} : vector<1x10xf32>, vector<10x256xf32>, vector<1x256xf32> -> vector<1x256xf32>
    %c0_18 = arith.constant 0 : index
    %c0_19 = arith.constant 0 : index
    %23 = vector.load %arg9[%c0_18, %c0_19] : memref<1x1xf32, #tpu.memory_space<vmem>>, vector<1x1xf32>
    %24 = vector.broadcast %23 : vector<1x1xf32> to vector<1x256xf32>
    %25 = arith.addf %22, %24 : vector<1x256xf32>
    %26 = math.tanh %25 : vector<1x256xf32>
    %cst_20 = arith.constant 5.000000e-01 : f32
    %27 = vector.broadcast %cst_20 : f32 to vector<1x256xf32>
    %28 = arith.mulf %27, %26 : vector<1x256xf32>
    %cst_21 = arith.constant 5.000000e-01 : f32
    %29 = vector.broadcast %cst_21 : f32 to vector<1x256xf32>
    %30 = arith.addf %28, %29 : vector<1x256xf32>
    %c0_22 = arith.constant 0 : index
    %c0_23 = arith.constant 0 : index
    %31 = vector.load %arg10[%c0_22, %c0_23] : memref<1x256xf32, #tpu.memory_space<vmem>>, vector<1x256xf32>
    tpu.vector_store %arg10[%c0_22, %c0_23], %30 {strides = array<i32>} : memref<1x256xf32, #tpu.memory_space<vmem>>, vector<1x256xf32>,
    return
  }
  func.func @transform_0(%arg0: i32) -> (i32, i32) {
    %c0_i32 = arith.constant 0 : i32
    %c0_i32_0 = arith.constant 0 : i32
    return %c0_i32, %arg0 : i32, i32
  }
  func.func @transform_1(%arg0: i32) -> (i32, i32) {
    %c0_i32 = arith.constant 0 : i32
    %c0_i32_0 = arith.constant 0 : i32
    %c0_i32_1 = arith.constant 0 : i32
    return %c0_i32, %c0_i32_0 : i32, i32
  }
  func.func @transform_2(%arg0: i32) -> (i32, i32) {
    %c0_i32 = arith.constant 0 : i32
    %c0_i32_0 = arith.constant 0 : i32
    %c0_i32_1 = arith.constant 0 : i32
    return %c0_i32, %c0_i32_0 : i32, i32
  }
  func.func @transform_3(%arg0: i32) -> (i32, i32) {
    %c0_i32 = arith.constant 0 : i32
    %c0_i32_0 = arith.constant 0 : i32
    %c0_i32_1 = arith.constant 0 : i32
    return %c0_i32, %c0_i32_0 : i32, i32
  }
  func.func @transform_4(%arg0: i32) -> (i32, i32) {
    %c0_i32 = arith.constant 0 : i32
    %c0_i32_0 = arith.constant 0 : i32
    %c0_i32_1 = arith.constant 0 : i32
    return %c0_i32, %c0_i32_0 : i32, i32
  }
  func.func @transform_5(%arg0: i32) -> (i32, i32) {
    %c0_i32 = arith.constant 0 : i32
    %c0_i32_0 = arith.constant 0 : i32
    %c0_i32_1 = arith.constant 0 : i32
    return %c0_i32, %c0_i32_0 : i32, i32
  }
  func.func @transform_6(%arg0: i32) -> (i32, i32) {
    %c0_i32 = arith.constant 0 : i32
    %c0_i32_0 = arith.constant 0 : i32
    %c0_i32_1 = arith.constant 0 : i32
    return %c0_i32, %c0_i32_0 : i32, i32
  }
  func.func @transform_7(%arg0: i32) -> (i32, i32) {
    %c0_i32 = arith.constant 0 : i32
    %c0_i32_0 = arith.constant 0 : i32
    %c0_i32_1 = arith.constant 0 : i32
    return %c0_i32, %c0_i32_0 : i32, i32
  }
  func.func @transform_8(%arg0: i32) -> (i32, i32) {
    %c0_i32 = arith.constant 0 : i32
    %c0_i32_0 = arith.constant 0 : i32
    %c0_i32_1 = arith.constant 0 : i32
    return %c0_i32, %c0_i32_0 : i32, i32
  }
  func.func @transform_9(%arg0: i32) -> (i32, i32) {
    %c0_i32 = arith.constant 0 : i32
    %c0_i32_0 = arith.constant 0 : i32
    return %c0_i32, %arg0 : i32, i32
  }
}

</mosaic_0001>

<llo_original>
// kernel: xyz_net2_forward.1
$region0: #{xyz_net2_forward.1}
  #allocation0 [shape = 'u32[]', space=smem, size = 0x4, offset = 0x4, fixed_abs, tag = 'smem constant byte address 0x4 - core index']
  #allocation1 [shape = 'u32[144,128]{1,0:T(1,128)}', space=vmem, size = 0x12000, scoped, tag = 'internal scratch']
  #allocation2 [shape = 'f32[1,1]{1,0:T(1,128)S(1)}', space=vmem, size = 0x200, scoped, tag = 'scoped memory for xyz_net2_forward.1']
  %s0 = inlined_call_operand.vmem [shape: f32[3,512], index: 0, kind: input, shape index: {}]
  %s1 = inlined_call_operand.vmem [shape: f32[128,3], index: 1, kind: input, shape index: {}]
  %s2 = inlined_call_operand.vmem [shape: f32[128,1], index: 2, kind: input, shape index: {}]
  %s3 = inlined_call_operand.vmem [shape: bf16[768,128], index: 3, kind: input, shape index: {}]
  %s4 = inlined_call_operand.vmem [shape: f32[768,1], index: 4, kind: input, shape index: {}]
  %s5 = inlined_call_operand.vmem [shape: bf16[10,768], index: 5, kind: input, shape index: {}]
  %s6 = inlined_call_operand.vmem [shape: f32[10,1], index: 6, kind: input, shape index: {}]
  %s7 = inlined_call_operand.vmem [shape: f32[1,10], index: 7, kind: input, shape index: {}]
  %s8 = inlined_call_operand.<no memory space> [shape: f32[1,1], index: 8, kind: input, shape index: {}]
  %s9 = inlined_call_operand.vmem [shape: f32[1,512], index: 9, kind: output, shape index: {}]
  %s10 = sld [smem:[#allocation0]]
  $region69: #{xyz_net2_forward.1} parent=0
    _
  %s12 = ssub.s32 1, %s10
  %s13 = scalar_select 0, %s12, %s10
  %v14 = vstv %s8
  %15 = vst [vmem:[#allocation2] sm:$0x1] %v14
  loop: start=0, step=1, limit=4
  $region2: #{xyz_net2_forward.1} parent=0 // loop_pre_header
    _
  $region3: #{xyz_net2_forward.1} parent=0 // loop_header
    %s17 = sphi 0, %s21
    %p18 = scmp.ge.s32.totalorder %s17, 4
    %s27 = sphi 0, %s29
    %s30 = sphi 0, %s27
    %s31 = sphi 0, %s30
    %s47 = sphi 0, %s31
    %s51 = sphi 0, %s51
    %s53 = sphi 0, %s51
    %s54 = sphi 0, %s53
    %s68 = sphi 0, %s54
    %s72 = sphi 0, %s72
    %s74 = sphi 0, %s72
    %s75 = sphi 0, %s74
    %s89 = sphi 0, %s75
    %s93 = sphi 0, %s93
    %s95 = sphi 0, %s93
    %s96 = sphi 0, %s95
    %s110 = sphi 0, %s96
    %s114 = sphi 0, %s114
    %s116 = sphi 0, %s114
    %s117 = sphi 0, %s116
    %s131 = sphi 0, %s117
    %s135 = sphi 0, %s135
    %s137 = sphi 0, %s135
    %s138 = sphi 0, %s137
    %s152 = sphi 0, %s138
    %s156 = sphi 0, %s156
    %s158 = sphi 0, %s156
    %s159 = sphi 0, %s158
    %s173 = sphi 0, %s159
    %s177 = sphi 0, %s177
    %s179 = sphi 0, %s177
    %s180 = sphi 0, %s179
    %s194 = sphi 0, %s180
    %s198 = sphi 0, %s198
    %s200 = sphi 0, %s198
    %s201 = sphi 0, %s200
    %s215 = sphi 0, %s201
    %s221 = sphi 0, %s223
    %s224 = sphi 0, %s221
    %s225 = sphi 0, %s224
    %s241 = sphi 0, %s225
  $region4: #{xyz_net2_forward.1} parent=0 // loop_header_branch
    %20 = sbr.rel (%p18) target = $region8
  $region5: #{xyz_net2_forward.1} parent=0 // loop_body
    %s22 = ssub.s32 %s17, 1
    %s23 = ssub.s32 %s17, 2
    %s24 = sadd.s32 %s17, 1
    %s25 = ssub.s32 %s17, %s24
    %p26 = scmp.eq.s32.totalorder %s25, 0
    %s28 = sadd.s32 %s27, 1
    %s29 = scalar_select %p26, %s27, %s28
    %p32 = pneg %p26
    %p33 = scmp.eq.s32.totalorder %s17, 1
    %p34 = por %p32, %p33
    %p35 = scmp.ne.s32.totalorder %s27, %s30
    %p36 = scmp.eq.s32.totalorder %s17, 0
    %p37 = por %p35, %p36
    %p38 = scmp.ne.s32.totalorder %s27, %s30
    %p39 = scmp.eq.s32.totalorder %s22, 1
    %p40 = por %p38, %p39
    %p41 = scmp.ne.s32.totalorder %s30, %s31
    %p42 = scmp.eq.s32.totalorder %s22, 0
    %p43 = por %p41, %p42
    %p44 = scmp.ne.s32.totalorder %s30, %s31
    %p45 = scmp.eq.s32.totalorder %s23, 1
    %p46 = por %p44, %p45
    %p48 = scmp.ne.s32.totalorder %s31, %s47
    %p49 = scmp.eq.s32.totalorder %s23, 0
    %p50 = por %p48, %p49
    %s52 = sadd.s32 %s51, 1
    %p55 = scmp.eq.s32.totalorder %s17, 1
    %p56 = scmp.ne.s32.totalorder %s51, %s53
    %p57 = scmp.eq.s32.totalorder %s17, 0
    %p58 = por %p56, %p57
    %p59 = scmp.ne.s32.totalorder %s51, %s53
    %p60 = scmp.eq.s32.totalorder %s22, 1
    %p61 = por %p59, %p60
    %p62 = scmp.ne.s32.totalorder %s53, %s54
    %p63 = scmp.eq.s32.totalorder %s22, 0
    %p64 = por %p62, %p63
    %p65 = scmp.ne.s32.totalorder %s53, %s54
    %p66 = scmp.eq.s32.totalorder %s23, 1
    %p67 = por %p65, %p66
    %p69 = scmp.ne.s32.totalorder %s54, %s68
    %p70 = scmp.eq.s32.totalorder %s23, 0
    %p71 = por %p69, %p70
    %s73 = sadd.s32 %s72, 1
    %p76 = scmp.eq.s32.totalorder %s17, 1
    %p77 = scmp.ne.s32.totalorder %s72, %s74
    %p78 = scmp.eq.s32.totalorder %s17, 0
    %p79 = por %p77, %p78
    %p80 = scmp.ne.s32.totalorder %s72, %s74
    %p81 = scmp.eq.s32.totalorder %s22, 1
    %p82 = por %p80, %p81
    %p83 = scmp.ne.s32.totalorder %s74, %s75
    %p84 = scmp.eq.s32.totalorder %s22, 0
    %p85 = por %p83, %p84
    %p86 = scmp.ne.s32.totalorder %s74, %s75
    %p87 = scmp.eq.s32.totalorder %s23, 1
    %p88 = por %p86, %p87
    %p90 = scmp.ne.s32.totalorder %s75, %s89
    %p91 = scmp.eq.s32.totalorder %s23, 0
    %p92 = por %p90, %p91
    %s94 = sadd.s32 %s93, 1
    %p97 = scmp.eq.s32.totalorder %s17, 1
    %p98 = scmp.ne.s32.totalorder %s93, %s95
    %p99 = scmp.eq.s32.totalorder %s17, 0
    %p100 = por %p98, %p99
    %p101 = scmp.ne.s32.totalorder %s93, %s95
    %p102 = scmp.eq.s32.totalorder %s22, 1
    %p103 = por %p101, %p102
    %p104 = scmp.ne.s32.totalorder %s95, %s96
    %p105 = scmp.eq.s32.totalorder %s22, 0
    %p106 = por %p104, %p105
    %p107 = scmp.ne.s32.totalorder %s95, %s96
    %p108 = scmp.eq.s32.totalorder %s23, 1
    %p109 = por %p107, %p108
    %p111 = scmp.ne.s32.totalorder %s96, %s110
    %p112 = scmp.eq.s32.totalorder %s23, 0
    %p113 = por %p111, %p112
    %s115 = sadd.s32 %s114, 1
    %p118 = scmp.eq.s32.totalorder %s17, 1
    %p119 = scmp.ne.s32.totalorder %s114, %s116
    %p120 = scmp.eq.s32.totalorder %s17, 0
    %p121 = por %p119, %p120
    %p122 = scmp.ne.s32.totalorder %s114, %s116
    %p123 = scmp.eq.s32.totalorder %s22, 1
    %p124 = por %p122, %p123
    %p125 = scmp.ne.s32.totalorder %s116, %s117
    %p126 = scmp.eq.s32.totalorder %s22, 0
    %p127 = por %p125, %p126
    %p128 = scmp.ne.s32.totalorder %s116, %s117
    %p129 = scmp.eq.s32.totalorder %s23, 1
    %p130 = por %p128, %p129
    %p132 = scmp.ne.s32.totalorder %s117, %s131
    %p133 = scmp.eq.s32.totalorder %s23, 0
    %p134 = por %p132, %p133
    %s136 = sadd.s32 %s135, 1
    %p139 = scmp.eq.s32.totalorder %s17, 1
    %p140 = scmp.ne.s32.totalorder %s135, %s137
    %p141 = scmp.eq.s32.totalorder %s17, 0
    %p142 = por %p140, %p141
    %p143 = scmp.ne.s32.totalorder %s135, %s137
    %p144 = scmp.eq.s32.totalorder %s22, 1
    %p145 = por %p143, %p144
    %p146 = scmp.ne.s32.totalorder %s137, %s138
    %p147 = scmp.eq.s32.totalorder %s22, 0
    %p148 = por %p146, %p147
    %p149 = scmp.ne.s32.totalorder %s137, %s138
    %p150 = scmp.eq.s32.totalorder %s23, 1
    %p151 = por %p149, %p150
    %p153 = scmp.ne.s32.totalorder %s138, %s152
    %p154 = scmp.eq.s32.totalorder %s23, 0
    %p155 = por %p153, %p154
    %s157 = sadd.s32 %s156, 1
    %p160 = scmp.eq.s32.totalorder %s17, 1
    %p161 = scmp.ne.s32.totalorder %s156, %s158
    %p162 = scmp.eq.s32.totalorder %s17, 0
    %p163 = por %p161, %p162
    %p164 = scmp.ne.s32.totalorder %s156, %s158
    %p165 = scmp.eq.s32.totalorder %s22, 1
    %p166 = por %p164, %p165
    %p167 = scmp.ne.s32.totalorder %s158, %s159
    %p168 = scmp.eq.s32.totalorder %s22, 0
    %p169 = por %p167, %p168
    %p170 = scmp.ne.s32.totalorder %s158, %s159
    %p171 = scmp.eq.s32.totalorder %s23, 1
    %p172 = por %p170, %p171
    %p174 = scmp.ne.s32.totalorder %s159, %s173
    %p175 = scmp.eq.s32.totalorder %s23, 0
    %p176 = por %p174, %p175
    %s178 = sadd.s32 %s177, 1
    %p181 = scmp.eq.s32.totalorder %s17, 1
    %p182 = scmp.ne.s32.totalorder %s177, %s179
    %p183 = scmp.eq.s32.totalorder %s17, 0
    %p184 = por %p182, %p183
    %p185 = scmp.ne.s32.totalorder %s177, %s179
    %p186 = scmp.eq.s32.totalorder %s22, 1
    %p187 = por %p185, %p186
    %p188 = scmp.ne.s32.totalorder %s179, %s180
    %p189 = scmp.eq.s32.totalorder %s22, 0
    %p190 = por %p188, %p189
    %p191 = scmp.ne.s32.totalorder %s179, %s180
    %p192 = scmp.eq.s32.totalorder %s23, 1
    %p193 = por %p191, %p192
    %p195 = scmp.ne.s32.totalorder %s180, %s194
    %p196 = scmp.eq.s32.totalorder %s23, 0
    %p197 = por %p195, %p196
    %s199 = sadd.s32 %s198, 1
    %p202 = scmp.eq.s32.totalorder %s17, 1
    %p203 = scmp.ne.s32.totalorder %s198, %s200
    %p204 = scmp.eq.s32.totalorder %s17, 0
    %p205 = por %p203, %p204
    %p206 = scmp.ne.s32.totalorder %s198, %s200
    %p207 = scmp.eq.s32.totalorder %s22, 1
    %p208 = por %p206, %p207
    %p209 = scmp.ne.s32.totalorder %s200, %s201
    %p210 = scmp.eq.s32.totalorder %s22, 0
    %p211 = por %p209, %p210
    %p212 = scmp.ne.s32.totalorder %s200, %s201
    %p213 = scmp.eq.s32.totalorder %s23, 1
    %p214 = por %p212, %p213
    %p216 = scmp.ne.s32.totalorder %s201, %s215
    %p217 = scmp.eq.s32.totalorder %s23, 0
    %p218 = por %p216, %p217
    %s219 = ssub.s32 %s17, %s24
    %p220 = scmp.eq.s32.totalorder %s219, 0
    %s222 = sadd.s32 %s221, 1
    %s223 = scalar_select %p220, %s221, %s222
    %p226 = pneg %p220
    %p227 = scmp.eq.s32.totalorder %s17, 1
    %p228 = por %p226, %p227
    %p229 = scmp.ne.s32.totalorder %s221, %s224
    %p230 = scmp.eq.s32.totalorder %s17, 0
    %p231 = por %p229, %p230
    %p232 = scmp.ne.s32.totalorder %s221, %s224
    %p233 = scmp.eq.s32.totalorder %s22, 1
    %p234 = por %p232, %p233
    %p235 = scmp.ne.s32.totalorder %s224, %s225
    %p236 = scmp.eq.s32.totalorder %s22, 0
    %p237 = por %p235, %p236
    %p238 = scmp.ne.s32.totalorder %s224, %s225
    %p239 = scmp.eq.s32.totalorder %s23, 1
    %p240 = por %p238, %p239
    %p242 = scmp.ne.s32.totalorder %s225, %s241
    %p243 = scmp.eq.s32.totalorder %s23, 0
    %p244 = por %p242, %p243
    %p245 = scmp.le.s32.totalorder 1, %s17
    %p246 = scmp.lt.s32.totalorder %s17, 3
    %p247 = pnand %p245, %p246
    %p248 = pneg %p247
    // Predicated region
    $region9: #{xyz_net2_forward.1} parent=5 // pred_check
      _
    $region10: #{xyz_net2_forward.1} parent=5 // pred_check_branch
      %250 = sbr.rel (%p247) target = $region12
    $region11: #{xyz_net2_forward.1} parent=5 // pred_region
      %s251 = ssub.s32 %s17, 1
      // Predicated region
      $region13: #{xyz_net2_forward.1} parent=11 // pred_check
        %p252 = pneg %p64
      $region14: #{xyz_net2_forward.1} parent=11 // pred_check_branch
        %254 = sbr.rel (%p252) target = $region16
      $region15: #{xyz_net2_forward.1} parent=11 // pred_region
        _
      $region16: #{xyz_net2_forward.1} parent=11 // pred_fallthru
        _
      // Predicated region
      $region17: #{xyz_net2_forward.1} parent=11 // pred_check
        %p255 = pneg %p85
      $region18: #{xyz_net2_forward.1} parent=11 // pred_check_branch
        %257 = sbr.rel (%p255) target = $region20
      $region19: #{xyz_net2_forward.1} parent=11 // pred_region
        _
      $region20: #{xyz_net2_forward.1} parent=11 // pred_fallthru
        _
      // Predicated region
      $region21: #{xyz_net2_forward.1} parent=11 // pred_check
        %p258 = pneg %p106
      $region22: #{xyz_net2_forward.1} parent=11 // pred_check_branch
        %260 = sbr.rel (%p258) target = $region24
      $region23: #{xyz_net2_forward.1} parent=11 // pred_region
        _
      $region24: #{xyz_net2_forward.1} parent=11 // pred_fallthru
        _
      // Predicated region
      $region25: #{xyz_net2_forward.1} parent=11 // pred_check
        %p261 = pneg %p127
      $region26: #{xyz_net2_forward.1} parent=11 // pred_check_branch
        %263 = sbr.rel (%p261) target = $region28
      $region27: #{xyz_net2_forward.1} parent=11 // pred_region
        _
      $region28: #{xyz_net2_forward.1} parent=11 // pred_fallthru
        _
      // Predicated region
      $region29: #{xyz_net2_forward.1} parent=11 // pred_check
        %p264 = pneg %p148
      $region30: #{xyz_net2_forward.1} parent=11 // pred_check_branch
        %266 = sbr.rel (%p264) target = $region32
      $region31: #{xyz_net2_forward.1} parent=11 // pred_region
        _
      $region32: #{xyz_net2_forward.1} parent=11 // pred_fallthru
        _
      // Predicated region
      $region33: #{xyz_net2_forward.1} parent=11 // pred_check
        %p267 = pneg %p169
      $region34: #{xyz_net2_forward.1} parent=11 // pred_check_branch
        %269 = sbr.rel (%p267) target = $region36
      $region35: #{xyz_net2_forward.1} parent=11 // pred_region
        _
      $region36: #{xyz_net2_forward.1} parent=11 // pred_fallthru
        _
      // Predicated region
      $region37: #{xyz_net2_forward.1} parent=11 // pred_check
        %p270 = pneg %p190
      $region38: #{xyz_net2_forward.1} parent=11 // pred_check_branch
        %272 = sbr.rel (%p270) target = $region40
      $region39: #{xyz_net2_forward.1} parent=11 // pred_region
        _
      $region40: #{xyz_net2_forward.1} parent=11 // pred_fallthru
        _
      // Predicated region
      $region41: #{xyz_net2_forward.1} parent=11 // pred_check
        %p273 = pneg %p211
      $region42: #{xyz_net2_forward.1} parent=11 // pred_check_branch
        %275 = sbr.rel (%p273) target = $region44
      $region43: #{xyz_net2_forward.1} parent=11 // pred_region
        _
      $region44: #{xyz_net2_forward.1} parent=11 // pred_fallthru
        _
    $region12: #{xyz_net2_forward.1} parent=5 // pred_fallthru
      _
    %p276 = scmp.lt.s32.totalorder %s17, 2
    // Predicated region
    $region45: #{xyz_net2_forward.1} parent=5 // pred_check
      %p277 = pneg %p276
    $region46: #{xyz_net2_forward.1} parent=5 // pred_check_branch
      %279 = sbr.rel (%p277) target = $region48
    $region47: #{xyz_net2_forward.1} parent=5 // pred_region
      // Predicated region
      $region49: #{xyz_net2_forward.1} parent=47 // pred_check
        %p280 = pneg %p37
      $region50: #{xyz_net2_forward.1} parent=47 // pred_check_branch
        %282 = sbr.rel (%p280) target = $region52
      $region51: #{xyz_net2_forward.1} parent=47 // pred_region
        %s283 = smul.u32 2, %s17
        %p284 = scmp.lt.s32.totalorder %s283, 3
        %s285 = scalar_select %p284, %s283, 3
        %s286 = smul.addr %s285, 4
        %s287 = scalar_lea.vmem %s0, %s286
        %s288 = smul.u32 2, %s17
      $region52: #{xyz_net2_forward.1} parent=47 // pred_fallthru
        _
    $region48: #{xyz_net2_forward.1} parent=5 // pred_fallthru
      _
    %p289 = scmp.le.s32.totalorder 1, %s17
    %p290 = scmp.lt.s32.totalorder %s17, 3
    %p291 = pnand %p289, %p290
    %p292 = pneg %p291
    // Predicated region
    $region53: #{xyz_net2_forward.1} parent=5 // pred_check
      _
    $region54: #{xyz_net2_forward.1} parent=5 // pred_check_branch
      %294 = sbr.rel (%p291) target = $region56
    $region55: #{xyz_net2_forward.1} parent=5 // pred_region
      %s295 = ssub.s32 %s17, 1
      %s296 = smul.u32 2, %s22
      %p297 = scmp.lt.s32.totalorder %s296, 3
      %s298 = scalar_select %p297, %s296, 3
      %s299 = smul.addr %s298, 4
      %s300 = scalar_lea.vmem %s0, %s299
      %p301 = pneg %p43
      %p302 = pneg %p40
      %p303 = pneg %p64
      %p304 = pneg %p61
      %p305 = pneg %p85
      %p306 = pneg %p82
      %p307 = pneg %p106
      %p308 = pneg %p103
      %p309 = pneg %p127
      %p310 = pneg %p124
      %p311 = pneg %p148
      %p312 = pneg %p145
      %p313 = pneg %p169
      %p314 = pneg %p166
      %p315 = pneg %p190
      %p316 = pneg %p187
      %p317 = pneg %p211
      %p318 = pneg %p208
      %p319 = pneg %p237
      %p320 = pneg %p234
      %s321 = smul.u32 2, %s22
      %p322 = scmp.lt.s32.totalorder %s321, 3
      %s323 = scalar_select %p322, %s321, 3
      %s324 = scalar_lea.vmem %s9, %s323
      %s325 = smul.u32 2, %s22
      %p326 = scmp.lt.s32.totalorder %s325, 3
      %s327 = scalar_select %p326, %s325, 3
      %s328 = smul.addr %s327, 4
      %s329 = scalar_lea.vmem %s0, %s328
      %s330 = smul.u32 2, %s22
      %s331 = smul.u32 2, %s22
      %p332 = scmp.lt.s32.totalorder %s331, 3
      %s333 = scalar_select %p332, %s331, 3
      %s334 = scalar_lea.vmem %s9, %s333
      %s335 = smul.u32 2, %s22
      %v337 = vld [vmem:[%s329] sm:$0x77]
      %v338 = vld [vmem:[%s1] sm:$0xff]
      %v339 = vld [vmem:[%s1 + $0x8] sm:$0xff]
      %v340 = vld [vmem:[%s1 + $0x10] sm:$0xff]
      %v341 = vld [vmem:[%s1 + $0x18] sm:$0xff]
      %v342 = vld [vmem:[%s1 + $0x20] sm:$0xff]
      %v343 = vld [vmem:[%s1 + $0x28] sm:$0xff]
      %v344 = vld [vmem:[%s1 + $0x30] sm:$0xff]
      %v345 = vld [vmem:[%s1 + $0x38] sm:$0xff]
      %v346 = vld [vmem:[%s1 + $0x40] sm:$0xff]
      %v347 = vld [vmem:[%s1 + $0x48] sm:$0xff]
      %v348 = vld [vmem:[%s1 + $0x50] sm:$0xff]
      %v349 = vld [vmem:[%s1 + $0x58] sm:$0xff]
      %v350 = vld [vmem:[%s1 + $0x60] sm:$0xff]
      %v351 = vld [vmem:[%s1 + $0x68] sm:$0xff]
      %v352 = vld [vmem:[%s1 + $0x70] sm:$0xff]
      %v353 = vld [vmem:[%s1 + $0x78] sm:$0xff]
      %v354 = vld [vmem:[%s2] sm:$0xff]
      %v355 = vld [vmem:[%s2 + $0x8] sm:$0xff]
      %v356 = vld [vmem:[%s2 + $0x10] sm:$0xff]
      %v357 = vld [vmem:[%s2 + $0x18] sm:$0xff]
      %v358 = vld [vmem:[%s2 + $0x20] sm:$0xff]
      %v359 = vld [vmem:[%s2 + $0x28] sm:$0xff]
      %v360 = vld [vmem:[%s2 + $0x30] sm:$0xff]
      %v361 = vld [vmem:[%s2 + $0x38] sm:$0xff]
      %v362 = vld [vmem:[%s2 + $0x40] sm:$0xff]
      %v363 = vld [vmem:[%s2 + $0x48] sm:$0xff]
      %v364 = vld [vmem:[%s2 + $0x50] sm:$0xff]
      %v365 = vld [vmem:[%s2 + $0x58] sm:$0xff]
      %v366 = vld [vmem:[%s2 + $0x60] sm:$0xff]
      %v367 = vld [vmem:[%s2 + $0x68] sm:$0xff]
      %v368 = vld [vmem:[%s2 + $0x70] sm:$0xff]
      %v369 = vld [vmem:[%s2 + $0x78] sm:$0xff]
      %371 = vset.pattern.permute.xlu0 0
      %372 = vperm.xlu0 %371, %v354
      %v373 = vpop.permute.xlu0 %372
      %376 = vset.pattern.permute.xlu0 0
      %377 = vperm.xlu0 %376, %v355
      %v378 = vpop.permute.xlu0 %377
      %381 = vset.pattern.permute.xlu0 0
      %382 = vperm.xlu0 %381, %v356
      %v383 = vpop.permute.xlu0 %382
      %386 = vset.pattern.permute.xlu0 0
      %387 = vperm.xlu0 %386, %v357
      %v388 = vpop.permute.xlu0 %387
      %391 = vset.pattern.permute.xlu0 0
      %392 = vperm.xlu0 %391, %v358
      %v393 = vpop.permute.xlu0 %392
      %396 = vset.pattern.permute.xlu0 0
      %397 = vperm.xlu0 %396, %v359
      %v398 = vpop.permute.xlu0 %397
      %401 = vset.pattern.permute.xlu0 0
      %402 = vperm.xlu0 %401, %v360
      %v403 = vpop.permute.xlu0 %402
      %406 = vset.pattern.permute.xlu0 0
      %407 = vperm.xlu0 %406, %v361
      %v408 = vpop.permute.xlu0 %407
      %411 = vset.pattern.permute.xlu0 0
      %412 = vperm.xlu0 %411, %v362
      %v413 = vpop.permute.xlu0 %412
      %416 = vset.pattern.permute.xlu0 0
      %417 = vperm.xlu0 %416, %v363
      %v418 = vpop.permute.xlu0 %417
      %421 = vset.pattern.permute.xlu0 0
      %422 = vperm.xlu0 %421, %v364
      %v423 = vpop.permute.xlu0 %422
      %426 = vset.pattern.permute.xlu0 0
      %427 = vperm.xlu0 %426, %v365
      %v428 = vpop.permute.xlu0 %427
      %431 = vset.pattern.permute.xlu0 0
      %432 = vperm.xlu0 %431, %v366
      %v433 = vpop.permute.xlu0 %432
      %436 = vset.pattern.permute.xlu0 0
      %437 = vperm.xlu0 %436, %v367
      %v438 = vpop.permute.xlu0 %437
      %441 = vset.pattern.permute.xlu0 0
      %442 = vperm.xlu0 %441, %v368
      %v443 = vpop.permute.xlu0 %442
      %446 = vset.pattern.permute.xlu0 0
      %447 = vperm.xlu0 %446, %v369
      %v448 = vpop.permute.xlu0 %447
      %v451 = vcombine.high %v337, %v337
      %vm452 = vcmask 23552
      %v454 = vsel %vm452, %v338, 0
      %v457 = vsel %vm452, %v339, 0
      %v460 = vsel %vm452, %v340, 0
      %v463 = vsel %vm452, %v341, 0
      %v466 = vsel %vm452, %v342, 0
      %v469 = vsel %vm452, %v343, 0
      %v472 = vsel %vm452, %v344, 0
      %v475 = vsel %vm452, %v345, 0
      %v478 = vsel %vm452, %v346, 0
      %v481 = vsel %vm452, %v347, 0
      %v484 = vsel %vm452, %v348, 0
      %v487 = vsel %vm452, %v349, 0
      %v490 = vsel %vm452, %v350, 0
      %v493 = vsel %vm452, %v351, 0
      %v496 = vsel %vm452, %v352, 0
      %v499 = vsel %vm452, %v353, 0
      %vm501 = vcmask 1042432
      %v502 = vsel %vm501, %v337, 0
      %v504 = vsel %vm501, %v451, 0
      %506 = vmatprep.subr.mxu0 %v504
      %507 = vmatpush1.msra.mxu0 %v502
      %508 = vmatprep.subr.mxu0 0.0
      %509 = vmatpush1.msra.mxu0 0.0
      %510 = vmatprep.subr.mxu0 0.0
      %511 = vmatpush1.msra.mxu0 0.0
      %512 = vmatprep.subr.mxu0 0.0
      %513 = vmatpush1.msra.mxu0 0.0
      %514 = vmatprep.subr.mxu0 0.0
      %515 = vmatpush1.msra.mxu0 0.0
      %516 = vmatprep.subr.mxu0 0.0
      %517 = vmatpush1.msra.mxu0 0.0
      %518 = vmatprep.subr.mxu0 0.0
      %519 = vmatpush1.msra.mxu0 0.0
      %520 = vmatprep.subr.mxu0 0.0
      %521 = vmatpush1.msra.mxu0 0.0
      %522 = vmatprep.subr.mxu0 0.0
      %523 = vmatpush1.msra.mxu0 0.0
      %524 = vmatprep.subr.mxu0 0.0
      %525 = vmatpush1.msra.mxu0 0.0
      %526 = vmatprep.subr.mxu0 0.0
      %527 = vmatpush1.msra.mxu0 0.0
      %528 = vmatprep.subr.mxu0 0.0
      %529 = vmatpush1.msra.mxu0 0.0
      %530 = vmatprep.subr.mxu0 0.0
      %531 = vmatpush1.msra.mxu0 0.0
      %532 = vmatprep.subr.mxu0 0.0
      %533 = vmatpush1.msra.mxu0 0.0
      %534 = vmatprep.subr.mxu0 0.0
      %535 = vmatpush1.msra.mxu0 0.0
      %536 = vmatprep.subr.mxu0 0.0
      %537 = vmatpush1.msra.mxu0 0.0
      %538 = vmatprep.subr.mxu0 0.0
      %539 = vmatpush1.msra.mxu0 0.0
      %540 = vmatprep.subr.mxu0 0.0
      %541 = vmatpush1.msra.mxu0 0.0
      %542 = vmatprep.subr.mxu0 0.0
      %543 = vmatpush1.msra.mxu0 0.0
      %544 = vmatprep.subr.mxu0 0.0
      %545 = vmatpush1.msra.mxu0 0.0
      %546 = vmatprep.subr.mxu0 0.0
      %547 = vmatpush1.msra.mxu0 0.0
      %548 = vmatprep.subr.mxu0 0.0
      %549 = vmatpush1.msra.mxu0 0.0
      %550 = vmatprep.subr.mxu0 0.0
      %551 = vmatpush1.msra.mxu0 0.0
      %552 = vmatprep.subr.mxu0 0.0
      %553 = vmatpush1.msra.mxu0 0.0
      %554 = vmatprep.subr.mxu0 0.0
      %555 = vmatpush1.msra.mxu0 0.0
      %556 = vmatprep.subr.mxu0 0.0
      %557 = vmatpush1.msra.mxu0 0.0
      %558 = vmatprep.subr.mxu0 0.0
      %559 = vmatpush1.msra.mxu0 0.0
      %560 = vmatprep.subr.mxu0 0.0
      %561 = vmatpush1.msra.mxu0 0.0
      %562 = vmatprep.subr.mxu0 0.0
      %563 = vmatpush1.msra.mxu0 0.0
      %564 = vmatprep.subr.mxu0 0.0
      %565 = vmatpush1.msra.mxu0 0.0
      %566 = vmatprep.subr.mxu0 0.0
      %567 = vmatpush1.msra.mxu0 0.0
      %568 = vmatprep.subr.mxu0 0.0
      %569 = vmatpush1.msra.mxu0 0.0
      %570 = vmatprep.mubr.f32.mxu0 0.0
      %571 = vmatmul.mubr.f32.gmra.mrb[0].mxu0 %v454
      %v572 = vpop.f32.mrb[0].mxu0
      %v573 = vadd.f32 %v373, %v572
      %v574 = vpop.f32.mrb[0].mxu0
      %v575 = vadd.f32 %v373, %v574
      %576 = vmatprep.mubr.f32.mxu0 0.0
      %577 = vmatmul.mubr.f32.gmra.mrb[0].mxu0 %v457
      %v578 = vpop.f32.mrb[0].mxu0
      %v579 = vadd.f32 %v378, %v578
      %v580 = vpop.f32.mrb[0].mxu0
      %v581 = vadd.f32 %v378, %v580
      %582 = vmatprep.mubr.f32.mxu0 0.0
      %583 = vmatmul.mubr.f32.gmra.mrb[0].mxu0 %v460
      %v584 = vpop.f32.mrb[0].mxu0
      %v585 = vadd.f32 %v383, %v584
      %v586 = vpop.f32.mrb[0].mxu0
      %v587 = vadd.f32 %v383, %v586
      %588 = vmatprep.mubr.f32.mxu0 0.0
      %589 = vmatmul.mubr.f32.gmra.mrb[0].mxu0 %v463
      %v590 = vpop.f32.mrb[0].mxu0
      %v591 = vadd.f32 %v388, %v590
      %v592 = vpop.f32.mrb[0].mxu0
      %v593 = vadd.f32 %v388, %v592
      %594 = vmatprep.mubr.f32.mxu0 0.0
      %595 = vmatmul.mubr.f32.gmra.mrb[0].mxu0 %v466
      %v596 = vpop.f32.mrb[0].mxu0
      %v597 = vadd.f32 %v393, %v596
      %v598 = vpop.f32.mrb[0].mxu0
      %v599 = vadd.f32 %v393, %v598
      %600 = vmatprep.mubr.f32.mxu0 0.0
      %601 = vmatmul.mubr.f32.gmra.mrb[0].mxu0 %v469
      %v602 = vpop.f32.mrb[0].mxu0
      %v603 = vadd.f32 %v398, %v602
      %v604 = vpop.f32.mrb[0].mxu0
      %v605 = vadd.f32 %v398, %v604
      %606 = vmatprep.mubr.f32.mxu0 0.0
      %607 = vmatmul.mubr.f32.gmra.mrb[0].mxu0 %v472
      %v608 = vpop.f32.mrb[0].mxu0
      %v609 = vadd.f32 %v403, %v608
      %v610 = vpop.f32.mrb[0].mxu0
      %v611 = vadd.f32 %v403, %v610
      %612 = vmatprep.mubr.f32.mxu0 0.0
      %613 = vmatmul.mubr.f32.gmra.mrb[0].mxu0 %v475
      %v614 = vpop.f32.mrb[0].mxu0
      %v615 = vadd.f32 %v408, %v614
      %v616 = vpop.f32.mrb[0].mxu0
      %v617 = vadd.f32 %v408, %v616
      %618 = vmatprep.mubr.f32.mxu0 0.0
      %619 = vmatmul.mubr.f32.gmra.mrb[0].mxu0 %v478
      %v620 = vpop.f32.mrb[0].mxu0
      %v621 = vadd.f32 %v413, %v620
      %v622 = vpop.f32.mrb[0].mxu0
      %v623 = vadd.f32 %v413, %v622
      %624 = vmatprep.mubr.f32.mxu0 0.0
      %625 = vmatmul.mubr.f32.gmra.mrb[0].mxu0 %v481
      %v626 = vpop.f32.mrb[0].mxu0
      %v627 = vadd.f32 %v418, %v626
      %v628 = vpop.f32.mrb[0].mxu0
      %v629 = vadd.f32 %v418, %v628
      %630 = vmatprep.mubr.f32.mxu0 0.0
      %631 = vmatmul.mubr.f32.gmra.mrb[0].mxu0 %v484
      %v632 = vpop.f32.mrb[0].mxu0
      %v633 = vadd.f32 %v423, %v632
      %v634 = vpop.f32.mrb[0].mxu0
      %v635 = vadd.f32 %v423, %v634
      %636 = vmatprep.mubr.f32.mxu0 0.0
      %637 = vmatmul.mubr.f32.gmra.mrb[0].mxu0 %v487
      %v638 = vpop.f32.mrb[0].mxu0
      %v639 = vadd.f32 %v428, %v638
      %v640 = vpop.f32.mrb[0].mxu0
      %v641 = vadd.f32 %v428, %v640
      %642 = vmatprep.mubr.f32.mxu0 0.0
      %643 = vmatmul.mubr.f32.gmra.mrb[0].mxu0 %v490
      %v644 = vpop.f32.mrb[0].mxu0
      %v645 = vadd.f32 %v433, %v644
      %v646 = vpop.f32.mrb[0].mxu0
      %v647 = vadd.f32 %v433, %v646
      %648 = vmatprep.mubr.f32.mxu0 0.0
      %649 = vmatmul.mubr.f32.gmra.mrb[0].mxu0 %v493
      %v650 = vpop.f32.mrb[0].mxu0
      %v651 = vadd.f32 %v438, %v650
      %v652 = vpop.f32.mrb[0].mxu0
      %v653 = vadd.f32 %v438, %v652
      %654 = vmatprep.mubr.f32.mxu0 0.0
      %655 = vmatmul.mubr.f32.gmra.mrb[0].mxu0 %v496
      %v656 = vpop.f32.mrb[0].mxu0
      %v657 = vadd.f32 %v443, %v656
      %v658 = vpop.f32.mrb[0].mxu0
      %v659 = vadd.f32 %v443, %v658
      %660 = vmatprep.mubr.f32.mxu0 0.0
      %661 = vmatmul.mubr.f32.gmra.mrb[0].mxu0 %v499
      %v662 = vpop.f32.mrb[0].mxu0
      %v663 = vadd.f32 %v448, %v662
      %v664 = vpop.f32.mrb[0].mxu0
      %v665 = vadd.f32 %v448, %v664
      %666 = vdwg.mxu0
      %v667 = vpack.c.bf16 %v579, %v573
      %v668 = vpack.c.bf16 %v581, %v575
      %v669 = vpack.c.bf16 %v591, %v585
      %v670 = vpack.c.bf16 %v593, %v587
      %v671 = vpack.c.bf16 %v603, %v597
      %v672 = vpack.c.bf16 %v605, %v599
      %v673 = vpack.c.bf16 %v615, %v609
      %v674 = vpack.c.bf16 %v617, %v611
      %v675 = vpack.c.bf16 %v627, %v621
      %v676 = vpack.c.bf16 %v629, %v623
      %v677 = vpack.c.bf16 %v639, %v633
      %v678 = vpack.c.bf16 %v641, %v635
      %v679 = vpack.c.bf16 %v651, %v645
      %v680 = vpack.c.bf16 %v653, %v647
      %v681 = vpack.c.bf16 %v663, %v657
      %v682 = vpack.c.bf16 %v665, %v659
      %v683 = vtanh.bf16.pop %v667
      %v684 = vtanh.bf16.pop %v668
      %v685 = vtanh.bf16.pop %v669
      %v686 = vtanh.bf16.pop %v670
      %v687 = vtanh.bf16.pop %v671
      %v688 = vtanh.bf16.pop %v672
      %v689 = vtanh.bf16.pop %v673
      %v690 = vtanh.bf16.pop %v674
      %v691 = vtanh.bf16.pop %v675
      %v692 = vtanh.bf16.pop %v676
      %v693 = vtanh.bf16.pop %v677
      %v694 = vtanh.bf16.pop %v678
      %v695 = vtanh.bf16.pop %v679
      %v696 = vtanh.bf16.pop %v680
      %v697 = vtanh.bf16.pop %v681
      %v698 = vtanh.bf16.pop %v682
      %v699 = vld [vmem:[%s3] sm:$0xf]
      %v700 = vld [vmem:[%s3 + $0x4] sm:$0xf]
      %v701 = vld [vmem:[%s3 + $0x8] sm:$0xf]
      %v702 = vld [vmem:[%s3 + $0xc] sm:$0xf]
      %v703 = vld [vmem:[%s3 + $0x10] sm:$0xf]
      %v704 = vld [vmem:[%s3 + $0x14] sm:$0xf]
      %v705 = vld [vmem:[%s3 + $0x18] sm:$0xf]
      %v706 = vld [vmem:[%s3 + $0x1c] sm:$0xf]
      %v707 = vld [vmem:[%s3 + $0x20] sm:$0xf]
      %v708 = vld [vmem:[%s3 + $0x24] sm:$0xf]
      %v709 = vld [vmem:[%s3 + $0x28] sm:$0xf]
      %v710 = vld [vmem:[%s3 + $0x2c] sm:$0xf]
      %v711 = vld [vmem:[%s3 + $0x30] sm:$0xf]
      %v712 = vld [vmem:[%s3 + $0x34] sm:$0xf]
      %v713 = vld [vmem:[%s3 + $0x38] sm:$0xf]
      %v714 = vld [vmem:[%s3 + $0x3c] sm:$0xf]
      %v715 = vld [vmem:[%s3 + $0x40] sm:$0xf]
      %v716 = vld [vmem:[%s3 + $0x44] sm:$0xf]
      %v717 = vld [vmem:[%s3 + $0x48] sm:$0xf]
      %v718 = vld [vmem:[%s3 + $0x4c] sm:$0xf]
      %v719 = vld [vmem:[%s3 + $0x50] sm:$0xf]
      %v720 = vld [vmem:[%s3 + $0x54] sm:$0xf]
      %v721 = vld [vmem:[%s3 + $0x58] sm:$0xf]
      %v722 = vld [vmem:[%s3 + $0x5c] sm:$0xf]
      %v723 = vld [vmem:[%s3 + $0x60] sm:$0xf]
      %v724 = vld [vmem:[%s3 + $0x64] sm:$0xf]
      %v725 = vld [vmem:[%s3 + $0x68] sm:$0xf]
      %v726 = vld [vmem:[%s3 + $0x6c] sm:$0xf]
      %v727 = vld [vmem:[%s3 + $0x70] sm:$0xf]
      %v728 = vld [vmem:[%s3 + $0x74] sm:$0xf]
      %v729 = vld [vmem:[%s3 + $0x78] sm:$0xf]
      %v730 = vld [vmem:[%s3 + $0x7c] sm:$0xf]
      %v731 = vld [vmem:[%s3 + $0x80] sm:$0xf]
      %v732 = vld [vmem:[%s3 + $0x84] sm:$0xf]
      %v733 = vld [vmem:[%s3 + $0x88] sm:$0xf]
      %v734 = vld [vmem:[%s3 + $0x8c] sm:$0xf]
      %v735 = vld [vmem:[%s3 + $0x90] sm:$0xf]
      %v736 = vld [vmem:[%s3 + $0x94] sm:$0xf]
      %v737 = vld [vmem:[%s3 + $0x98] sm:$0xf]
      %v738 = vld [vmem:[%s3 + $0x9c] sm:$0xf]
      %v739 = vld [vmem:[%s3 + $0xa0] sm:$0xf]
      %v740 = vld [vmem:[%s3 + $0xa4] sm:$0xf]
      %v741 = vld [vmem:[%s3 + $0xa8] sm:$0xf]
      %v742 = vld [vmem:[%s3 + $0xac] sm:$0xf]
      %v743 = vld [vmem:[%s3 + $0xb0] sm:$0xf]
      %v744 = vld [vmem:[%s3 + $0xb4] sm:$0xf]
      %v745 = vld [vmem:[%s3 + $0xb8] sm:$0xf]
      %v746 = vld [vmem:[%s3 + $0xbc] sm:$0xf]
      %v747 = vld [vmem:[%s3 + $0xc0] sm:$0xf]
      %v748 = vld [vmem:[%s3 + $0xc4] sm:$0xf]
      %v749 = vld [vmem:[%s3 + $0xc8] sm:$0xf]
      %v750 = vld [vmem:[%s3 + $0xcc] sm:$0xf]
      %v751 = vld [vmem:[%s3 + $0xd0] sm:$0xf]
      %v752 = vld [vmem:[%s3 + $0xd4] sm:$0xf]
      %v753 = vld [vmem:[%s3 + $0xd8] sm:$0xf]
      %v754 = vld [vmem:[%s3 + $0xdc] sm:$0xf]
      %v755 = vld [vmem:[%s3 + $0xe0] sm:$0xf]
      %v756 = vld [vmem:[%s3 + $0xe4] sm:$0xf]
      %v757 = vld [vmem:[%s3 + $0xe8] sm:$0xf]
      %v758 = vld [vmem:[%s3 + $0xec] sm:$0xf]
      %v759 = vld [vmem:[%s3 + $0xf0] sm:$0xf]
      %v760 = vld [vmem:[%s3 + $0xf4] sm:$0xf]
      %v761 = vld [vmem:[%s3 + $0xf8] sm:$0xf]
      %v762 = vld [vmem:[%s3 + $0xfc] sm:$0xf]
      %v763 = vld [vmem:[%s3 + $0x100] sm:$0xf]
      %v764 = vld [vmem:[%s3 + $0x104] sm:$0xf]
      %v765 = vld [vmem:[%s3 + $0x108] sm:$0xf]
      %v766 = vld [vmem:[%s3 + $0x10c] sm:$0xf]
      %v767 = vld [vmem:[%s3 + $0x110] sm:$0xf]
      %v768 = vld [vmem:[%s3 + $0x114] sm:$0xf]
      %v769 = vld [vmem:[%s3 + $0x118] sm:$0xf]
      %v770 = vld [vmem:[%s3 + $0x11c] sm:$0xf]
      %v771 = vld [vmem:[%s3 + $0x120] sm:$0xf]
      %v772 = vld [vmem:[%s3 + $0x124] sm:$0xf]
      %v773 = vld [vmem:[%s3 + $0x128] sm:$0xf]
      %v774 = vld [vmem:[%s3 + $0x12c] sm:$0xf]
      %v775 = vld [vmem:[%s3 + $0x130] sm:$0xf]
      %v776 = vld [vmem:[%s3 + $0x134] sm:$0xf]
      %v777 = vld [vmem:[%s3 + $0x138] sm:$0xf]
      %v778 = vld [vmem:[%s3 + $0x13c] sm:$0xf]
      %v779 = vld [vmem:[%s3 + $0x140] sm:$0xf]
      %v780 = vld [vmem:[%s3 + $0x144] sm:$0xf]
      %v781 = vld [vmem:[%s3 + $0x148] sm:$0xf]
      %v782 = vld [vmem:[%s3 + $0x14c] sm:$0xf]
      %v783 = vld [vmem:[%s3 + $0x150] sm:$0xf]
      %v784 = vld [vmem:[%s3 + $0x154] sm:$0xf]
      %v785 = vld [vmem:[%s3 + $0x158] sm:$0xf]
      %v786 = vld [vmem:[%s3 + $0x15c] sm:$0xf]
      %v787 = vld [vmem:[%s3 + $0x160] sm:$0xf]
      %v788 = vld [vmem:[%s3 + $0x164] sm:$0xf]
      %v789 = vld [vmem:[%s3 + $0x168] sm:$0xf]
      %v790 = vld [vmem:[%s3 + $0x16c] sm:$0xf]
      %v791 = vld [vmem:[%s3 + $0x170] sm:$0xf]
      %v792 = vld [vmem:[%s3 + $0x174] sm:$0xf]
      %v793 = vld [vmem:[%s3 + $0x178] sm:$0xf]
      %v794 = vld [vmem:[%s3 + $0x17c] sm:$0xf]
      %v795 = vld [vmem:[%s4] sm:$0xff]
      %v796 = vld [vmem:[%s4 + $0x8] sm:$0xff]
      %v797 = vld [vmem:[%s4 + $0x10] sm:$0xff]
      %v798 = vld [vmem:[%s4 + $0x18] sm:$0xff]
      %v799 = vld [vmem:[%s4 + $0x20] sm:$0xff]
      %v800 = vld [vmem:[%s4 + $0x28] sm:$0xff]
      %v801 = vld [vmem:[%s4 + $0x30] sm:$0xff]
      %v802 = vld [vmem:[%s4 + $0x38] sm:$0xff]
      %v803 = vld [vmem:[%s4 + $0x40] sm:$0xff]
      %v804 = vld [vmem:[%s4 + $0x48] sm:$0xff]
      %v805 = vld [vmem:[%s4 + $0x50] sm:$0xff]
      %v806 = vld [vmem:[%s4 + $0x58] sm:$0xff]
      %v807 = vld [vmem:[%s4 + $0x60] sm:$0xff]
      %v808 = vld [vmem:[%s4 + $0x68] sm:$0xff]
      %v809 = vld [vmem:[%s4 + $0x70] sm:$0xff]
      %v810 = vld [vmem:[%s4 + $0x78] sm:$0xff]
      %v811 = vld [vmem:[%s4 + $0x80] sm:$0xff]
      %v812 = vld [vmem:[%s4 + $0x88] sm:$0xff]
      %v813 = vld [vmem:[%s4 + $0x90] sm:$0xff]
      %v814 = vld [vmem:[%s4 + $0x98] sm:$0xff]
      %v815 = vld [vmem:[%s4 + $0xa0] sm:$0xff]
      %v816 = vld [vmem:[%s4 + $0xa8] sm:$0xff]
      %v817 = vld [vmem:[%s4 + $0xb0] sm:$0xff]
      %v818 = vld [vmem:[%s4 + $0xb8] sm:$0xff]
      %v819 = vld [vmem:[%s4 + $0xc0] sm:$0xff]
      %v820 = vld [vmem:[%s4 + $0xc8] sm:$0xff]
      %v821 = vld [vmem:[%s4 + $0xd0] sm:$0xff]
      %v822 = vld [vmem:[%s4 + $0xd8] sm:$0xff]
      %v823 = vld [vmem:[%s4 + $0xe0] sm:$0xff]
      %v824 = vld [vmem:[%s4 + $0xe8] sm:$0xff]
      %v825 = vld [vmem:[%s4 + $0xf0] sm:$0xff]
      %v826 = vld [vmem:[%s4 + $0xf8] sm:$0xff]
      %v827 = vld [vmem:[%s4 + $0x100] sm:$0xff]
      %v828 = vld [vmem:[%s4 + $0x108] sm:$0xff]
      %v829 = vld [vmem:[%s4 + $0x110] sm:$0xff]
      %v830 = vld [vmem:[%s4 + $0x118] sm:$0xff]
      %v831 = vld [vmem:[%s4 + $0x120] sm:$0xff]
      %v832 = vld [vmem:[%s4 + $0x128] sm:$0xff]
      %v833 = vld [vmem:[%s4 + $0x130] sm:$0xff]
      %v834 = vld [vmem:[%s4 + $0x138] sm:$0xff]
      %v835 = vld [vmem:[%s4 + $0x140] sm:$0xff]
      %v836 = vld [vmem:[%s4 + $0x148] sm:$0xff]
      %v837 = vld [vmem:[%s4 + $0x150] sm:$0xff]
      %v838 = vld [vmem:[%s4 + $0x158] sm:$0xff]
      %v839 = vld [vmem:[%s4 + $0x160] sm:$0xff]
      %v840 = vld [vmem:[%s4 + $0x168] sm:$0xff]
      %v841 = vld [vmem:[%s4 + $0x170] sm:$0xff]
      %v842 = vld [vmem:[%s4 + $0x178] sm:$0xff]
      %v843 = vld [vmem:[%s4 + $0x180] sm:$0xff]
      %v844 = vld [vmem:[%s4 + $0x188] sm:$0xff]
      %v845 = vld [vmem:[%s4 + $0x190] sm:$0xff]
      %v846 = vld [vmem:[%s4 + $0x198] sm:$0xff]
      %v847 = vld [vmem:[%s4 + $0x1a0] sm:$0xff]
      %v848 = vld [vmem:[%s4 + $0x1a8] sm:$0xff]
      %v849 = vld [vmem:[%s4 + $0x1b0] sm:$0xff]
      %v850 = vld [vmem:[%s4 + $0x1b8] sm:$0xff]
      %v851 = vld [vmem:[%s4 + $0x1c0] sm:$0xff]
      %v852 = vld [vmem:[%s4 + $0x1c8] sm:$0xff]
      %v853 = vld [vmem:[%s4 + $0x1d0] sm:$0xff]
      %v854 = vld [vmem:[%s4 + $0x1d8] sm:$0xff]
      %v855 = vld [vmem:[%s4 + $0x1e0] sm:$0xff]
      %v856 = vld [vmem:[%s4 + $0x1e8] sm:$0xff]
      %v857 = vld [vmem:[%s4 + $0x1f0] sm:$0xff]
      %v858 = vld [vmem:[%s4 + $0x1f8] sm:$0xff]
      %v859 = vld [vmem:[%s4 + $0x200] sm:$0xff]
      %v860 = vld [vmem:[%s4 + $0x208] sm:$0xff]
      %v861 = vld [vmem:[%s4 + $0x210] sm:$0xff]
      %v862 = vld [vmem:[%s4 + $0x218] sm:$0xff]
      %v863 = vld [vmem:[%s4 + $0x220] sm:$0xff]
      %v864 = vld [vmem:[%s4 + $0x228] sm:$0xff]
      %v865 = vld [vmem:[%s4 + $0x230] sm:$0xff]
      %v866 = vld [vmem:[%s4 + $0x238] sm:$0xff]
      %v867 = vld [vmem:[%s4 + $0x240] sm:$0xff]
      %v868 = vld [vmem:[%s4 + $0x248] sm:$0xff]
      %v869 = vld [vmem:[%s4 + $0x250] sm:$0xff]
      %v870 = vld [vmem:[%s4 + $0x258] sm:$0xff]
      %v871 = vld [vmem:[%s4 + $0x260] sm:$0xff]
      %v872 = vld [vmem:[%s4 + $0x268] sm:$0xff]
      %v873 = vld [vmem:[%s4 + $0x270] sm:$0xff]
      %v874 = vld [vmem:[%s4 + $0x278] sm:$0xff]
      %v875 = vld [vmem:[%s4 + $0x280] sm:$0xff]
      %v876 = vld [vmem:[%s4 + $0x288] sm:$0xff]
      %v877 = vld [vmem:[%s4 + $0x290] sm:$0xff]
      %v878 = vld [vmem:[%s4 + $0x298] sm:$0xff]
      %v879 = vld [vmem:[%s4 + $0x2a0] sm:$0xff]
      %v880 = vld [vmem:[%s4 + $0x2a8] sm:$0xff]
      %v881 = vld [vmem:[%s4 + $0x2b0] sm:$0xff]
      %v882 = vld [vmem:[%s4 + $0x2b8] sm:$0xff]
      %v883 = vld [vmem:[%s4 + $0x2c0] sm:$0xff]
      %v884 = vld [vmem:[%s4 + $0x2c8] sm:$0xff]
      %v885 = vld [vmem:[%s4 + $0x2d0] sm:$0xff]
      %v886 = vld [vmem:[%s4 + $0x2d8] sm:$0xff]
      %v887 = vld [vmem:[%s4 + $0x2e0] sm:$0xff]
      %v888 = vld [vmem:[%s4 + $0x2e8] sm:$0xff]
      %v889 = vld [vmem:[%s4 + $0x2f0] sm:$0xff]
      %v890 = vld [vmem:[%s4 + $0x2f8] sm:$0xff]
      %892 = vset.pattern.permute.xlu0 0
      %893 = vperm.xlu0 %892, %v795
      %v894 = vpop.permute.xlu0 %893
      %897 = vset.pattern.permute.xlu0 0
      %898 = vperm.xlu0 %897, %v796
      %v899 = vpop.permute.xlu0 %898
      %902 = vset.pattern.permute.xlu0 0
      %903 = vperm.xlu0 %902, %v797
      %v904 = vpop.permute.xlu0 %903
      %907 = vset.pattern.permute.xlu0 0
      %908 = vperm.xlu0 %907, %v798
      %v909 = vpop.permute.xlu0 %908
      %912 = vset.pattern.permute.xlu0 0
      %913 = vperm.xlu0 %912, %v799
      %v914 = vpop.permute.xlu0 %913
      %917 = vset.pattern.permute.xlu0 0
      %918 = vperm.xlu0 %917, %v800
      %v919 = vpop.permute.xlu0 %918
      %922 = vset.pattern.permute.xlu0 0
      %923 = vperm.xlu0 %922, %v801
      %v924 = vpop.permute.xlu0 %923
      %927 = vset.pattern.permute.xlu0 0
      %928 = vperm.xlu0 %927, %v802
      %v929 = vpop.permute.xlu0 %928
      %932 = vset.pattern.permute.xlu0 0
      %933 = vperm.xlu0 %932, %v803
      %v934 = vpop.permute.xlu0 %933
      %937 = vset.pattern.permute.xlu0 0
      %938 = vperm.xlu0 %937, %v804
      %v939 = vpop.permute.xlu0 %938
      %942 = vset.pattern.permute.xlu0 0
      %943 = vperm.xlu0 %942, %v805
      %v944 = vpop.permute.xlu0 %943
      %947 = vset.pattern.permute.xlu0 0
      %948 = vperm.xlu0 %947, %v806
      %v949 = vpop.permute.xlu0 %948
      %952 = vset.pattern.permute.xlu0 0
      %953 = vperm.xlu0 %952, %v807
      %v954 = vpop.permute.xlu0 %953
      %957 = vset.pattern.permute.xlu0 0
      %958 = vperm.xlu0 %957, %v808
      %v959 = vpop.permute.xlu0 %958
      %962 = vset.pattern.permute.xlu0 0
      %963 = vperm.xlu0 %962, %v809
      %v964 = vpop.permute.xlu0 %963
      %967 = vset.pattern.permute.xlu0 0
      %968 = vperm.xlu0 %967, %v810
      %v969 = vpop.permute.xlu0 %968
      %972 = vset.pattern.permute.xlu0 0
      %973 = vperm.xlu0 %972, %v811
      %v974 = vpop.permute.xlu0 %973
      %977 = vset.pattern.permute.xlu0 0
      %978 = vperm.xlu0 %977, %v812
      %v979 = vpop.permute.xlu0 %978
      %982 = vset.pattern.permute.xlu0 0
      %983 = vperm.xlu0 %982, %v813
      %v984 = vpop.permute.xlu0 %983
      %987 = vset.pattern.permute.xlu0 0
      %988 = vperm.xlu0 %987, %v814
      %v989 = vpop.permute.xlu0 %988
      %992 = vset.pattern.permute.xlu0 0
      %993 = vperm.xlu0 %992, %v815
      %v994 = vpop.permute.xlu0 %993
      %997 = vset.pattern.permute.xlu0 0
      %998 = vperm.xlu0 %997, %v816
      %v999 = vpop.permute.xlu0 %998
      %1002 = vset.pattern.permute.xlu0 0
      %1003 = vperm.xlu0 %1002, %v817
      %v1004 = vpop.permute.xlu0 %1003
      %1007 = vset.pattern.permute.xlu0 0
      %1008 = vperm.xlu0 %1007, %v818
      %v1009 = vpop.permute.xlu0 %1008
      %1012 = vset.pattern.permute.xlu0 0
      %1013 = vperm.xlu0 %1012, %v819
      %v1014 = vpop.permute.xlu0 %1013
      %1017 = vset.pattern.permute.xlu0 0
      %1018 = vperm.xlu0 %1017, %v820
      %v1019 = vpop.permute.xlu0 %1018
      %1022 = vset.pattern.permute.xlu0 0
      %1023 = vperm.xlu0 %1022, %v821
      %v1024 = vpop.permute.xlu0 %1023
      %1027 = vset.pattern.permute.xlu0 0
      %1028 = vperm.xlu0 %1027, %v822
      %v1029 = vpop.permute.xlu0 %1028
      %1032 = vset.pattern.permute.xlu0 0
      %1033 = vperm.xlu0 %1032, %v823
      %v1034 = vpop.permute.xlu0 %1033
      %1037 = vset.pattern.permute.xlu0 0
      %1038 = vperm.xlu0 %1037, %v824
      %v1039 = vpop.permute.xlu0 %1038
      %1042 = vset.pattern.permute.xlu0 0
      %1043 = vperm.xlu0 %1042, %v825
      %v1044 = vpop.permute.xlu0 %1043
      %1047 = vset.pattern.permute.xlu0 0
      %1048 = vperm.xlu0 %1047, %v826
      %v1049 = vpop.permute.xlu0 %1048
      %1052 = vset.pattern.permute.xlu0 0
      %1053 = vperm.xlu0 %1052, %v827
      %v1054 = vpop.permute.xlu0 %1053
      %1057 = vset.pattern.permute.xlu0 0
      %1058 = vperm.xlu0 %1057, %v828
      %v1059 = vpop.permute.xlu0 %1058
      %1062 = vset.pattern.permute.xlu0 0
      %1063 = vperm.xlu0 %1062, %v829
      %v1064 = vpop.permute.xlu0 %1063
      %1067 = vset.pattern.permute.xlu0 0
      %1068 = vperm.xlu0 %1067, %v830
      %v1069 = vpop.permute.xlu0 %1068
      %1072 = vset.pattern.permute.xlu0 0
      %1073 = vperm.xlu0 %1072, %v831
      %v1074 = vpop.permute.xlu0 %1073
      %1077 = vset.pattern.permute.xlu0 0
      %1078 = vperm.xlu0 %1077, %v832
      %v1079 = vpop.permute.xlu0 %1078
      %1082 = vset.pattern.permute.xlu0 0
      %1083 = vperm.xlu0 %1082, %v833
      %v1084 = vpop.permute.xlu0 %1083
      %1087 = vset.pattern.permute.xlu0 0
      %1088 = vperm.xlu0 %1087, %v834
      %v1089 = vpop.permute.xlu0 %1088
      %1092 = vset.pattern.permute.xlu0 0
      %1093 = vperm.xlu0 %1092, %v835
      %v1094 = vpop.permute.xlu0 %1093
      %1097 = vset.pattern.permute.xlu0 0
      %1098 = vperm.xlu0 %1097, %v836
      %v1099 = vpop.permute.xlu0 %1098
      %1102 = vset.pattern.permute.xlu0 0
      %1103 = vperm.xlu0 %1102, %v837
      %v1104 = vpop.permute.xlu0 %1103
      %1107 = vset.pattern.permute.xlu0 0
      %1108 = vperm.xlu0 %1107, %v838
      %v1109 = vpop.permute.xlu0 %1108
      %1112 = vset.pattern.permute.xlu0 0
      %1113 = vperm.xlu0 %1112, %v839
      %v1114 = vpop.permute.xlu0 %1113
      %1117 = vset.pattern.permute.xlu0 0
      %1118 = vperm.xlu0 %1117, %v840
      %v1119 = vpop.permute.xlu0 %1118
      %1122 = vset.pattern.permute.xlu0 0
      %1123 = vperm.xlu0 %1122, %v841
      %v1124 = vpop.permute.xlu0 %1123
      %1127 = vset.pattern.permute.xlu0 0
      %1128 = vperm.xlu0 %1127, %v842
      %v1129 = vpop.permute.xlu0 %1128
      %1132 = vset.pattern.permute.xlu0 0
      %1133 = vperm.xlu0 %1132, %v843
      %v1134 = vpop.permute.xlu0 %1133
      %1137 = vset.pattern.permute.xlu0 0
      %1138 = vperm.xlu0 %1137, %v844
      %v1139 = vpop.permute.xlu0 %1138
      %1142 = vset.pattern.permute.xlu0 0
      %1143 = vperm.xlu0 %1142, %v845
      %v1144 = vpop.permute.xlu0 %1143
      %1147 = vset.pattern.permute.xlu0 0
      %1148 = vperm.xlu0 %1147, %v846
      %v1149 = vpop.permute.xlu0 %1148
      %1152 = vset.pattern.permute.xlu0 0
      %1153 = vperm.xlu0 %1152, %v847
      %v1154 = vpop.permute.xlu0 %1153
      %1157 = vset.pattern.permute.xlu0 0
      %1158 = vperm.xlu0 %1157, %v848
      %v1159 = vpop.permute.xlu0 %1158
      %1162 = vset.pattern.permute.xlu0 0
      %1163 = vperm.xlu0 %1162, %v849
      %v1164 = vpop.permute.xlu0 %1163
      %1167 = vset.pattern.permute.xlu0 0
      %1168 = vperm.xlu0 %1167, %v850
      %v1169 = vpop.permute.xlu0 %1168
      %1172 = vset.pattern.permute.xlu0 0
      %1173 = vperm.xlu0 %1172, %v851
      %v1174 = vpop.permute.xlu0 %1173
      %1177 = vset.pattern.permute.xlu0 0
      %1178 = vperm.xlu0 %1177, %v852
      %v1179 = vpop.permute.xlu0 %1178
      %1182 = vset.pattern.permute.xlu0 0
      %1183 = vperm.xlu0 %1182, %v853
      %v1184 = vpop.permute.xlu0 %1183
      %1187 = vset.pattern.permute.xlu0 0
      %1188 = vperm.xlu0 %1187, %v854
      %v1189 = vpop.permute.xlu0 %1188
      %1192 = vset.pattern.permute.xlu0 0
      %1193 = vperm.xlu0 %1192, %v855
      %v1194 = vpop.permute.xlu0 %1193
      %1197 = vset.pattern.permute.xlu0 0
      %1198 = vperm.xlu0 %1197, %v856
      %v1199 = vpop.permute.xlu0 %1198
      %1202 = vset.pattern.permute.xlu0 0
      %1203 = vperm.xlu0 %1202, %v857
      %v1204 = vpop.permute.xlu0 %1203
      %1207 = vset.pattern.permute.xlu0 0
      %1208 = vperm.xlu0 %1207, %v858
      %v1209 = vpop.permute.xlu0 %1208
      %1212 = vset.pattern.permute.xlu0 0
      %1213 = vperm.xlu0 %1212, %v859
      %v1214 = vpop.permute.xlu0 %1213
      %1217 = vset.pattern.permute.xlu0 0
      %1218 = vperm.xlu0 %1217, %v860
      %v1219 = vpop.permute.xlu0 %1218
      %1222 = vset.pattern.permute.xlu0 0
      %1223 = vperm.xlu0 %1222, %v861
      %v1224 = vpop.permute.xlu0 %1223
      %1227 = vset.pattern.permute.xlu0 0
      %1228 = vperm.xlu0 %1227, %v862
      %v1229 = vpop.permute.xlu0 %1228
      %1232 = vset.pattern.permute.xlu0 0
      %1233 = vperm.xlu0 %1232, %v863
      %v1234 = vpop.permute.xlu0 %1233
      %1237 = vset.pattern.permute.xlu0 0
      %1238 = vperm.xlu0 %1237, %v864
      %v1239 = vpop.permute.xlu0 %1238
      %1242 = vset.pattern.permute.xlu0 0
      %1243 = vperm.xlu0 %1242, %v865
      %v1244 = vpop.permute.xlu0 %1243
      %1247 = vset.pattern.permute.xlu0 0
      %1248 = vperm.xlu0 %1247, %v866
      %v1249 = vpop.permute.xlu0 %1248
      %1252 = vset.pattern.permute.xlu0 0
      %1253 = vperm.xlu0 %1252, %v867
      %v1254 = vpop.permute.xlu0 %1253
      %1257 = vset.pattern.permute.xlu0 0
      %1258 = vperm.xlu0 %1257, %v868
      %v1259 = vpop.permute.xlu0 %1258
      %1262 = vset.pattern.permute.xlu0 0
      %1263 = vperm.xlu0 %1262, %v869
      %v1264 = vpop.permute.xlu0 %1263
      %1267 = vset.pattern.permute.xlu0 0
      %1268 = vperm.xlu0 %1267, %v870
      %v1269 = vpop.permute.xlu0 %1268
      %1272 = vset.pattern.permute.xlu0 0
      %1273 = vperm.xlu0 %1272, %v871
      %v1274 = vpop.permute.xlu0 %1273
      %1277 = vset.pattern.permute.xlu0 0
      %1278 = vperm.xlu0 %1277, %v872
      %v1279 = vpop.permute.xlu0 %1278
      %1282 = vset.pattern.permute.xlu0 0
      %1283 = vperm.xlu0 %1282, %v873
      %v1284 = vpop.permute.xlu0 %1283
      %1287 = vset.pattern.permute.xlu0 0
      %1288 = vperm.xlu0 %1287, %v874
      %v1289 = vpop.permute.xlu0 %1288
      %1292 = vset.pattern.permute.xlu0 0
      %1293 = vperm.xlu0 %1292, %v875
      %v1294 = vpop.permute.xlu0 %1293
      %1297 = vset.pattern.permute.xlu0 0
      %1298 = vperm.xlu0 %1297, %v876
      %v1299 = vpop.permute.xlu0 %1298
      %1302 = vset.pattern.permute.xlu0 0
      %1303 = vperm.xlu0 %1302, %v877
      %v1304 = vpop.permute.xlu0 %1303
      %1307 = vset.pattern.permute.xlu0 0
      %1308 = vperm.xlu0 %1307, %v878
      %v1309 = vpop.permute.xlu0 %1308
      %1312 = vset.pattern.permute.xlu0 0
      %1313 = vperm.xlu0 %1312, %v879
      %v1314 = vpop.permute.xlu0 %1313
      %1317 = vset.pattern.permute.xlu0 0
      %1318 = vperm.xlu0 %1317, %v880
      %v1319 = vpop.permute.xlu0 %1318
      %1322 = vset.pattern.permute.xlu0 0
      %1323 = vperm.xlu0 %1322, %v881
      %v1324 = vpop.permute.xlu0 %1323
      %1327 = vset.pattern.permute.xlu0 0
      %1328 = vperm.xlu0 %1327, %v882
      %v1329 = vpop.permute.xlu0 %1328
      %1332 = vset.pattern.permute.xlu0 0
      %1333 = vperm.xlu0 %1332, %v883
      %v1334 = vpop.permute.xlu0 %1333
      %1337 = vset.pattern.permute.xlu0 0
      %1338 = vperm.xlu0 %1337, %v884
      %v1339 = vpop.permute.xlu0 %1338
      %1342 = vset.pattern.permute.xlu0 0
      %1343 = vperm.xlu0 %1342, %v885
      %v1344 = vpop.permute.xlu0 %1343
      %1347 = vset.pattern.permute.xlu0 0
      %1348 = vperm.xlu0 %1347, %v886
      %v1349 = vpop.permute.xlu0 %1348
      %1352 = vset.pattern.permute.xlu0 0
      %1353 = vperm.xlu0 %1352, %v887
      %v1354 = vpop.permute.xlu0 %1353
      %1357 = vset.pattern.permute.xlu0 0
      %1358 = vperm.xlu0 %1357, %v888
      %v1359 = vpop.permute.xlu0 %1358
      %1362 = vset.pattern.permute.xlu0 0
      %1363 = vperm.xlu0 %1362, %v889
      %v1364 = vpop.permute.xlu0 %1363
      %1367 = vset.pattern.permute.xlu0 0
      %1368 = vperm.xlu0 %1367, %v890
      %v1369 = vpop.permute.xlu0 %1368
      %v1467 = vunpack.c.l.b16 %v699
      %v1468 = vunpack.c.l.b16 %v700
      %v1469 = vunpack.c.l.b16 %v701
      %v1470 = vunpack.c.l.b16 %v702
      %v1471 = vunpack.c.l.b16 %v703
      %v1472 = vunpack.c.l.b16 %v704
      %v1473 = vunpack.c.l.b16 %v705
      %v1474 = vunpack.c.l.b16 %v706
      %v1475 = vunpack.c.l.b16 %v707
      %v1476 = vunpack.c.l.b16 %v708
      %v1477 = vunpack.c.l.b16 %v709
      %v1478 = vunpack.c.l.b16 %v710
      %v1479 = vunpack.c.l.b16 %v711
      %v1480 = vunpack.c.l.b16 %v712
      %v1481 = vunpack.c.l.b16 %v713
      %v1482 = vunpack.c.l.b16 %v714
      %v1483 = vunpack.c.l.b16 %v715
      %v1484 = vunpack.c.l.b16 %v716
      %v1485 = vunpack.c.l.b16 %v717
      %v1486 = vunpack.c.l.b16 %v718
      %v1487 = vunpack.c.l.b16 %v719
      %v1488 = vunpack.c.l.b16 %v720
      %v1489 = vunpack.c.l.b16 %v721
      %v1490 = vunpack.c.l.b16 %v722
      %v1491 = vunpack.c.l.b16 %v723
      %v1492 = vunpack.c.l.b16 %v724
      %v1493 = vunpack.c.l.b16 %v725
      %v1494 = vunpack.c.l.b16 %v726
      %v1495 = vunpack.c.l.b16 %v727
      %v1496 = vunpack.c.l.b16 %v728
      %v1497 = vunpack.c.l.b16 %v729
      %v1498 = vunpack.c.l.b16 %v730
      %v1499 = vunpack.c.l.b16 %v731
      %v1500 = vunpack.c.l.b16 %v732
      %v1501 = vunpack.c.l.b16 %v733
      %v1502 = vunpack.c.l.b16 %v734
      %v1503 = vunpack.c.l.b16 %v735
      %v1504 = vunpack.c.l.b16 %v736
      %v1505 = vunpack.c.l.b16 %v737
      %v1506 = vunpack.c.l.b16 %v738
      %v1507 = vunpack.c.l.b16 %v739
      %v1508 = vunpack.c.l.b16 %v740
      %v1509 = vunpack.c.l.b16 %v741
      %v1510 = vunpack.c.l.b16 %v742
      %v1511 = vunpack.c.l.b16 %v743
      %v1512 = vunpack.c.l.b16 %v744
      %v1513 = vunpack.c.l.b16 %v745
      %v1514 = vunpack.c.l.b16 %v746
      %v1515 = vunpack.c.l.b16 %v747
      %v1516 = vunpack.c.l.b16 %v748
      %v1517 = vunpack.c.l.b16 %v749
      %v1518 = vunpack.c.l.b16 %v750
      %v1519 = vunpack.c.l.b16 %v751
      %v1520 = vunpack.c.l.b16 %v752
      %v1521 = vunpack.c.l.b16 %v753
      %v1522 = vunpack.c.l.b16 %v754
      %v1523 = vunpack.c.l.b16 %v755
      %v1524 = vunpack.c.l.b16 %v756
      %v1525 = vunpack.c.l.b16 %v757
      %v1526 = vunpack.c.l.b16 %v758
      %v1527 = vunpack.c.l.b16 %v759
      %v1528 = vunpack.c.l.b16 %v760
      %v1529 = vunpack.c.l.b16 %v761
      %v1530 = vunpack.c.l.b16 %v762
      %v1531 = vunpack.c.l.b16 %v763
      %v1532 = vunpack.c.l.b16 %v764
      %v1533 = vunpack.c.l.b16 %v765
      %v1534 = vunpack.c.l.b16 %v766
      %v1535 = vunpack.c.l.b16 %v767
      %v1536 = vunpack.c.l.b16 %v768
      %v1537 = vunpack.c.l.b16 %v769
      %v1538 = vunpack.c.l.b16 %v770
      %v1539 = vunpack.c.l.b16 %v771
      %v1540 = vunpack.c.l.b16 %v772
      %v1541 = vunpack.c.l.b16 %v773
      %v1542 = vunpack.c.l.b16 %v774
      %v1543 = vunpack.c.l.b16 %v775
      %v1544 = vunpack.c.l.b16 %v776
      %v1545 = vunpack.c.l.b16 %v777
      %v1546 = vunpack.c.l.b16 %v778
      %v1547 = vunpack.c.l.b16 %v779
      %v1548 = vunpack.c.l.b16 %v780
      %v1549 = vunpack.c.l.b16 %v781
      %v1550 = vunpack.c.l.b16 %v782
      %v1551 = vunpack.c.l.b16 %v783
      %v1552 = vunpack.c.l.b16 %v784
      %v1553 = vunpack.c.l.b16 %v785
      %v1554 = vunpack.c.l.b16 %v786
      %v1555 = vunpack.c.l.b16 %v787
      %v1556 = vunpack.c.l.b16 %v788
      %v1557 = vunpack.c.l.b16 %v789
      %v1558 = vunpack.c.l.b16 %v790
      %v1559 = vunpack.c.l.b16 %v791
      %v1560 = vunpack.c.l.b16 %v792
      %v1561 = vunpack.c.l.b16 %v793
      %v1562 = vunpack.c.l.b16 %v794
      %v1563 = vpack.c.b16 %v1468, %v1467
      %v1564 = vpack.c.b16 %v1470, %v1469
      %v1565 = vpack.c.b16 %v1472, %v1471
      %v1566 = vpack.c.b16 %v1474, %v1473
      %v1567 = vpack.c.b16 %v1476, %v1475
      %v1568 = vpack.c.b16 %v1478, %v1477
      %v1569 = vpack.c.b16 %v1480, %v1479
      %v1570 = vpack.c.b16 %v1482, %v1481
      %v1571 = vpack.c.b16 %v1484, %v1483
      %v1572 = vpack.c.b16 %v1486, %v1485
      %v1573 = vpack.c.b16 %v1488, %v1487
      %v1574 = vpack.c.b16 %v1490, %v1489
      %v1575 = vpack.c.b16 %v1492, %v1491
      %v1576 = vpack.c.b16 %v1494, %v1493
      %v1577 = vpack.c.b16 %v1496, %v1495
      %v1578 = vpack.c.b16 %v1498, %v1497
      %v1579 = vpack.c.b16 %v1500, %v1499
      %v1580 = vpack.c.b16 %v1502, %v1501
      %v1581 = vpack.c.b16 %v1504, %v1503
      %v1582 = vpack.c.b16 %v1506, %v1505
      %v1583 = vpack.c.b16 %v1508, %v1507
      %v1584 = vpack.c.b16 %v1510, %v1509
      %v1585 = vpack.c.b16 %v1512, %v1511
      %v1586 = vpack.c.b16 %v1514, %v1513
      %v1587 = vpack.c.b16 %v1516, %v1515
      %v1588 = vpack.c.b16 %v1518, %v1517
      %v1589 = vpack.c.b16 %v1520, %v1519
      %v1590 = vpack.c.b16 %v1522, %v1521
      %v1591 = vpack.c.b16 %v1524, %v1523
      %v1592 = vpack.c.b16 %v1526, %v1525
      %v1593 = vpack.c.b16 %v1528, %v1527
      %v1594 = vpack.c.b16 %v1530, %v1529
      %v1595 = vpack.c.b16 %v1532, %v1531
      %v1596 = vpack.c.b16 %v1534, %v1533
      %v1597 = vpack.c.b16 %v1536, %v1535
      %v1598 = vpack.c.b16 %v1538, %v1537
      %v1599 = vpack.c.b16 %v1540, %v1539
      %v1600 = vpack.c.b16 %v1542, %v1541
      %v1601 = vpack.c.b16 %v1544, %v1543
      %v1602 = vpack.c.b16 %v1546, %v1545
      %v1603 = vpack.c.b16 %v1548, %v1547
      %v1604 = vpack.c.b16 %v1550, %v1549
      %v1605 = vpack.c.b16 %v1552, %v1551
      %v1606 = vpack.c.b16 %v1554, %v1553
      %v1607 = vpack.c.b16 %v1556, %v1555
      %v1608 = vpack.c.b16 %v1558, %v1557
      %v1609 = vpack.c.b16 %v1560, %v1559
      %v1610 = vpack.c.b16 %v1562, %v1561
      %1659 = vmatprep.subr.bf16.mxu0 %v684
      %1660 = vmatpush1.bf16.msra.mxu0 %v683
      %1661 = vmatprep.subr.bf16.mxu0 %v686
      %1662 = vmatpush1.bf16.msra.mxu0 %v685
      %1663 = vmatprep.subr.bf16.mxu0 %v688
      %1664 = vmatpush1.bf16.msra.mxu0 %v687
      %1665 = vmatprep.subr.bf16.mxu0 %v690
      %1666 = vmatpush1.bf16.msra.mxu0 %v689
      %1667 = vmatprep.subr.bf16.mxu0 %v692
      %1668 = vmatpush1.bf16.msra.mxu0 %v691
      %1669 = vmatprep.subr.bf16.mxu0 %v694
      %1670 = vmatpush1.bf16.msra.mxu0 %v693
      %1671 = vmatprep.subr.bf16.mxu0 %v696
      %1672 = vmatpush1.bf16.msra.mxu0 %v695
      %1673 = vmatprep.subr.bf16.mxu0 %v698
      %1674 = vmatpush1.bf16.msra.mxu0 %v697
      %1675 = vmatprep.subr.bf16.mxu0 0
      %1676 = vmatpush1.bf16.msra.mxu0 0
      %1677 = vmatprep.subr.bf16.mxu0 0
      %1678 = vmatpush1.bf16.msra.mxu0 0
      %1679 = vmatprep.subr.bf16.mxu0 0
      %1680 = vmatpush1.bf16.msra.mxu0 0
      %1681 = vmatprep.subr.bf16.mxu0 0
      %1682 = vmatpush1.bf16.msra.mxu0 0
      %1683 = vmatprep.subr.bf16.mxu0 0
      %1684 = vmatpush1.bf16.msra.mxu0 0
      %1685 = vmatprep.subr.bf16.mxu0 0
      %1686 = vmatpush1.bf16.msra.mxu0 0
      %1687 = vmatprep.subr.bf16.mxu0 0
      %1688 = vmatpush1.bf16.msra.mxu0 0
      %1689 = vmatprep.subr.bf16.mxu0 0
      %1690 = vmatpush1.bf16.msra.mxu0 0
      %1691 = vmatprep.mubr.bf16.mxu0 0
      %1692 = vmatmul.mubr.bf16.gmra.mrb[0].mxu0 %v1563
      %v1693 = vpop.f32.mrb[0].mxu0
      %v1694 = vadd.f32 %v894, %v1693
      %v1695 = vpop.f32.mrb[0].mxu0
      %v1696 = vadd.f32 %v894, %v1695
      %v1697 = vpop.f32.mrb[0].mxu0
      %v1698 = vadd.f32 %v899, %v1697
      %v1699 = vpop.f32.mrb[0].mxu0
      %v1700 = vadd.f32 %v899, %v1699
      %1701 = vmatprep.mubr.bf16.mxu0 0
      %1702 = vmatmul.mubr.bf16.gmra.mrb[0].mxu0 %v1564
      %v1703 = vpop.f32.mrb[0].mxu0
      %v1704 = vadd.f32 %v904, %v1703
      %v1705 = vpop.f32.mrb[0].mxu0
      %v1706 = vadd.f32 %v904, %v1705
      %v1707 = vpop.f32.mrb[0].mxu0
      %v1708 = vadd.f32 %v909, %v1707
      %v1709 = vpop.f32.mrb[0].mxu0
      %v1710 = vadd.f32 %v909, %v1709
      %1711 = vmatprep.mubr.bf16.mxu0 0
      %1712 = vmatmul.mubr.bf16.gmra.mrb[0].mxu0 %v1565
      %v1713 = vpop.f32.mrb[0].mxu0
      %v1714 = vadd.f32 %v914, %v1713
      %v1715 = vpop.f32.mrb[0].mxu0
      %v1716 = vadd.f32 %v914, %v1715
      %v1717 = vpop.f32.mrb[0].mxu0
      %v1718 = vadd.f32 %v919, %v1717
      %v1719 = vpop.f32.mrb[0].mxu0
      %v1720 = vadd.f32 %v919, %v1719
      %1721 = vmatprep.mubr.bf16.mxu0 0
      %1722 = vmatmul.mubr.bf16.gmra.mrb[0].mxu0 %v1566
      %v1723 = vpop.f32.mrb[0].mxu0
      %v1724 = vadd.f32 %v924, %v1723
      %v1725 = vpop.f32.mrb[0].mxu0
      %v1726 = vadd.f32 %v924, %v1725
      %v1727 = vpop.f32.mrb[0].mxu0
      %v1728 = vadd.f32 %v929, %v1727
      %v1729 = vpop.f32.mrb[0].mxu0
      %v1730 = vadd.f32 %v929, %v1729
      %1731 = vmatprep.mubr.bf16.mxu0 0
      %1732 = vmatmul.mubr.bf16.gmra.mrb[0].mxu0 %v1567
      %v1733 = vpop.f32.mrb[0].mxu0
      %v1734 = vadd.f32 %v934, %v1733
      %v1735 = vpop.f32.mrb[0].mxu0
      %v1736 = vadd.f32 %v934, %v1735
      %v1737 = vpop.f32.mrb[0].mxu0
      %v1738 = vadd.f32 %v939, %v1737
      %v1739 = vpop.f32.mrb[0].mxu0
      %v1740 = vadd.f32 %v939, %v1739
      %1741 = vmatprep.mubr.bf16.mxu0 0
      %1742 = vmatmul.mubr.bf16.gmra.mrb[0].mxu0 %v1568
      %v1743 = vpop.f32.mrb[0].mxu0
      %v1744 = vadd.f32 %v944, %v1743
      %v1745 = vpop.f32.mrb[0].mxu0
      %v1746 = vadd.f32 %v944, %v1745
      %v1747 = vpop.f32.mrb[0].mxu0
      %v1748 = vadd.f32 %v949, %v1747
      %v1749 = vpop.f32.mrb[0].mxu0
      %v1750 = vadd.f32 %v949, %v1749
      %1751 = vmatprep.mubr.bf16.mxu0 0
      %1752 = vmatmul.mubr.bf16.gmra.mrb[0].mxu0 %v1569
      %v1753 = vpop.f32.mrb[0].mxu0
      %v1754 = vadd.f32 %v954, %v1753
      %v1755 = vpop.f32.mrb[0].mxu0
      %v1756 = vadd.f32 %v954, %v1755
      %v1757 = vpop.f32.mrb[0].mxu0
      %v1758 = vadd.f32 %v959, %v1757
      %v1759 = vpop.f32.mrb[0].mxu0
      %v1760 = vadd.f32 %v959, %v1759
      %1761 = vmatprep.mubr.bf16.mxu0 0
      %1762 = vmatmul.mubr.bf16.gmra.mrb[0].mxu0 %v1570
      %v1763 = vpop.f32.mrb[0].mxu0
      %v1764 = vadd.f32 %v964, %v1763
      %v1765 = vpop.f32.mrb[0].mxu0
      %v1766 = vadd.f32 %v964, %v1765
      %v1767 = vpop.f32.mrb[0].mxu0
      %v1768 = vadd.f32 %v969, %v1767
      %v1769 = vpop.f32.mrb[0].mxu0
      %v1770 = vadd.f32 %v969, %v1769
      %1771 = vmatprep.mubr.bf16.mxu0 0
      %1772 = vmatmul.mubr.bf16.gmra.mrb[0].mxu0 %v1571
      %v1773 = vpop.f32.mrb[0].mxu0
      %v1774 = vadd.f32 %v974, %v1773
      %v1775 = vpop.f32.mrb[0].mxu0
      %v1776 = vadd.f32 %v974, %v1775
      %v1777 = vpop.f32.mrb[0].mxu0
      %v1778 = vadd.f32 %v979, %v1777
      %v1779 = vpop.f32.mrb[0].mxu0
      %v1780 = vadd.f32 %v979, %v1779
      %1781 = vmatprep.mubr.bf16.mxu0 0
      %1782 = vmatmul.mubr.bf16.gmra.mrb[0].mxu0 %v1572
      %v1783 = vpop.f32.mrb[0].mxu0
      %v1784 = vadd.f32 %v984, %v1783
      %v1785 = vpop.f32.mrb[0].mxu0
      %v1786 = vadd.f32 %v984, %v1785
      %v1787 = vpop.f32.mrb[0].mxu0
      %v1788 = vadd.f32 %v989, %v1787
      %v1789 = vpop.f32.mrb[0].mxu0
      %v1790 = vadd.f32 %v989, %v1789
      %1791 = vmatprep.mubr.bf16.mxu0 0
      %1792 = vmatmul.mubr.bf16.gmra.mrb[0].mxu0 %v1573
      %v1793 = vpop.f32.mrb[0].mxu0
      %v1794 = vadd.f32 %v994, %v1793
      %v1795 = vpop.f32.mrb[0].mxu0
      %v1796 = vadd.f32 %v994, %v1795
      %v1797 = vpop.f32.mrb[0].mxu0
      %v1798 = vadd.f32 %v999, %v1797
      %v1799 = vpop.f32.mrb[0].mxu0
      %v1800 = vadd.f32 %v999, %v1799
      %1801 = vmatprep.mubr.bf16.mxu0 0
      %1802 = vmatmul.mubr.bf16.gmra.mrb[0].mxu0 %v1574
      %v1803 = vpop.f32.mrb[0].mxu0
      %v1804 = vadd.f32 %v1004, %v1803
      %v1805 = vpop.f32.mrb[0].mxu0
      %v1806 = vadd.f32 %v1004, %v1805
      %v1807 = vpop.f32.mrb[0].mxu0
      %v1808 = vadd.f32 %v1009, %v1807
      %v1809 = vpop.f32.mrb[0].mxu0
      %v1810 = vadd.f32 %v1009, %v1809
      %1811 = vmatprep.mubr.bf16.mxu0 0
      %1812 = vmatmul.mubr.bf16.gmra.mrb[0].mxu0 %v1575
      %v1813 = vpop.f32.mrb[0].mxu0
      %v1814 = vadd.f32 %v1014, %v1813
      %v1815 = vpop.f32.mrb[0].mxu0
      %v1816 = vadd.f32 %v1014, %v1815
      %v1817 = vpop.f32.mrb[0].mxu0
      %v1818 = vadd.f32 %v1019, %v1817
      %v1819 = vpop.f32.mrb[0].mxu0
      %v1820 = vadd.f32 %v1019, %v1819
      %1821 = vmatprep.mubr.bf16.mxu0 0
      %1822 = vmatmul.mubr.bf16.gmra.mrb[0].mxu0 %v1576
      %v1823 = vpop.f32.mrb[0].mxu0
      %v1824 = vadd.f32 %v1024, %v1823
      %v1825 = vpop.f32.mrb[0].mxu0
      %v1826 = vadd.f32 %v1024, %v1825
      %v1827 = vpop.f32.mrb[0].mxu0
      %v1828 = vadd.f32 %v1029, %v1827
      %v1829 = vpop.f32.mrb[0].mxu0
      %v1830 = vadd.f32 %v1029, %v1829
      %1831 = vmatprep.mubr.bf16.mxu0 0
      %1832 = vmatmul.mubr.bf16.gmra.mrb[0].mxu0 %v1577
      %v1833 = vpop.f32.mrb[0].mxu0
      %v1834 = vadd.f32 %v1034, %v1833
      %v1835 = vpop.f32.mrb[0].mxu0
      %v1836 = vadd.f32 %v1034, %v1835
      %v1837 = vpop.f32.mrb[0].mxu0
      %v1838 = vadd.f32 %v1039, %v1837
      %v1839 = vpop.f32.mrb[0].mxu0
      %v1840 = vadd.f32 %v1039, %v1839
      %1841 = vmatprep.mubr.bf16.mxu0 0
      %1842 = vmatmul.mubr.bf16.gmra.mrb[0].mxu0 %v1578
      %v1843 = vpop.f32.mrb[0].mxu0
      %v1844 = vadd.f32 %v1044, %v1843
      %v1845 = vpop.f32.mrb[0].mxu0
      %v1846 = vadd.f32 %v1044, %v1845
      %v1847 = vpop.f32.mrb[0].mxu0
      %v1848 = vadd.f32 %v1049, %v1847
      %v1849 = vpop.f32.mrb[0].mxu0
      %v1850 = vadd.f32 %v1049, %v1849
      %1851 = vmatprep.mubr.bf16.mxu0 0
      %1852 = vmatmul.mubr.bf16.gmra.mrb[0].mxu0 %v1579
      %v1853 = vpop.f32.mrb[0].mxu0
      %v1854 = vadd.f32 %v1054, %v1853
      %v1855 = vpop.f32.mrb[0].mxu0
      %v1856 = vadd.f32 %v1054, %v1855
      %v1857 = vpop.f32.mrb[0].mxu0
      %v1858 = vadd.f32 %v1059, %v1857
      %v1859 = vpop.f32.mrb[0].mxu0
      %v1860 = vadd.f32 %v1059, %v1859
      %1861 = vmatprep.mubr.bf16.mxu0 0
      %1862 = vmatmul.mubr.bf16.gmra.mrb[0].mxu0 %v1580
      %v1863 = vpop.f32.mrb[0].mxu0
      %v1864 = vadd.f32 %v1064, %v1863
      %v1865 = vpop.f32.mrb[0].mxu0
      %v1866 = vadd.f32 %v1064, %v1865
      %v1867 = vpop.f32.mrb[0].mxu0
      %v1868 = vadd.f32 %v1069, %v1867
      %v1869 = vpop.f32.mrb[0].mxu0
      %v1870 = vadd.f32 %v1069, %v1869
      %1871 = vmatprep.mubr.bf16.mxu0 0
      %1872 = vmatmul.mubr.bf16.gmra.mrb[0].mxu0 %v1581
      %v1873 = vpop.f32.mrb[0].mxu0
      %v1874 = vadd.f32 %v1074, %v1873
      %v1875 = vpop.f32.mrb[0].mxu0
      %v1876 = vadd.f32 %v1074, %v1875
      %v1877 = vpop.f32.mrb[0].mxu0
      %v1878 = vadd.f32 %v1079, %v1877
      %v1879 = vpop.f32.mrb[0].mxu0
      %v1880 = vadd.f32 %v1079, %v1879
      %1881 = vmatprep.mubr.bf16.mxu0 0
      %1882 = vmatmul.mubr.bf16.gmra.mrb[0].mxu0 %v1582
      %v1883 = vpop.f32.mrb[0].mxu0
      %v1884 = vadd.f32 %v1084, %v1883
      %v1885 = vpop.f32.mrb[0].mxu0
      %v1886 = vadd.f32 %v1084, %v1885
      %v1887 = vpop.f32.mrb[0].mxu0
      %v1888 = vadd.f32 %v1089, %v1887
      %v1889 = vpop.f32.mrb[0].mxu0
      %v1890 = vadd.f32 %v1089, %v1889
      %1891 = vmatprep.mubr.bf16.mxu0 0
      %1892 = vmatmul.mubr.bf16.gmra.mrb[0].mxu0 %v1583
      %v1893 = vpop.f32.mrb[0].mxu0
      %v1894 = vadd.f32 %v1094, %v1893
      %v1895 = vpop.f32.mrb[0].mxu0
      %v1896 = vadd.f32 %v1094, %v1895
      %v1897 = vpop.f32.mrb[0].mxu0
      %v1898 = vadd.f32 %v1099, %v1897
      %v1899 = vpop.f32.mrb[0].mxu0
      %v1900 = vadd.f32 %v1099, %v1899
      %1901 = vmatprep.mubr.bf16.mxu0 0
      %1902 = vmatmul.mubr.bf16.gmra.mrb[0].mxu0 %v1584
      %v1903 = vpop.f32.mrb[0].mxu0
      %v1904 = vadd.f32 %v1104, %v1903
      %v1905 = vpop.f32.mrb[0].mxu0
      %v1906 = vadd.f32 %v1104, %v1905
      %v1907 = vpop.f32.mrb[0].mxu0
      %v1908 = vadd.f32 %v1109, %v1907
      %v1909 = vpop.f32.mrb[0].mxu0
      %v1910 = vadd.f32 %v1109, %v1909
      %1911 = vmatprep.mubr.bf16.mxu0 0
      %1912 = vmatmul.mubr.bf16.gmra.mrb[0].mxu0 %v1585
      %v1913 = vpop.f32.mrb[0].mxu0
      %v1914 = vadd.f32 %v1114, %v1913
      %v1915 = vpop.f32.mrb[0].mxu0
      %v1916 = vadd.f32 %v1114, %v1915
      %v1917 = vpop.f32.mrb[0].mxu0
      %v1918 = vadd.f32 %v1119, %v1917
      %v1919 = vpop.f32.mrb[0].mxu0
      %v1920 = vadd.f32 %v1119, %v1919
      %1921 = vmatprep.mubr.bf16.mxu0 0
      %1922 = vmatmul.mubr.bf16.gmra.mrb[0].mxu0 %v1586
      %v1923 = vpop.f32.mrb[0].mxu0
      %v1924 = vadd.f32 %v1124, %v1923
      %v1925 = vpop.f32.mrb[0].mxu0
      %v1926 = vadd.f32 %v1124, %v1925
      %v1927 = vpop.f32.mrb[0].mxu0
      %v1928 = vadd.f32 %v1129, %v1927
      %v1929 = vpop.f32.mrb[0].mxu0
      %v1930 = vadd.f32 %v1129, %v1929
      %1931 = vmatprep.mubr.bf16.mxu0 0
      %1932 = vmatmul.mubr.bf16.gmra.mrb[0].mxu0 %v1587
      %v1933 = vpop.f32.mrb[0].mxu0
      %v1934 = vadd.f32 %v1134, %v1933
      %v1935 = vpop.f32.mrb[0].mxu0
      %v1936 = vadd.f32 %v1134, %v1935
      %v1937 = vpop.f32.mrb[0].mxu0
      %v1938 = vadd.f32 %v1139, %v1937
      %v1939 = vpop.f32.mrb[0].mxu0
      %v1940 = vadd.f32 %v1139, %v1939
      %1941 = vmatprep.mubr.bf16.mxu0 0
      %1942 = vmatmul.mubr.bf16.gmra.mrb[0].mxu0 %v1588
      %v1943 = vpop.f32.mrb[0].mxu0
      %v1944 = vadd.f32 %v1144, %v1943
      %v1945 = vpop.f32.mrb[0].mxu0
      %v1946 = vadd.f32 %v1144, %v1945
      %v1947 = vpop.f32.mrb[0].mxu0
      %v1948 = vadd.f32 %v1149, %v1947
      %v1949 = vpop.f32.mrb[0].mxu0
      %v1950 = vadd.f32 %v1149, %v1949
      %1951 = vmatprep.mubr.bf16.mxu0 0
      %1952 = vmatmul.mubr.bf16.gmra.mrb[0].mxu0 %v1589
      %v1953 = vpop.f32.mrb[0].mxu0
      %v1954 = vadd.f32 %v1154, %v1953
      %v1955 = vpop.f32.mrb[0].mxu0
      %v1956 = vadd.f32 %v1154, %v1955
      %v1957 = vpop.f32.mrb[0].mxu0
      %v1958 = vadd.f32 %v1159, %v1957
      %v1959 = vpop.f32.mrb[0].mxu0
      %v1960 = vadd.f32 %v1159, %v1959
      %1961 = vmatprep.mubr.bf16.mxu0 0
      %1962 = vmatmul.mubr.bf16.gmra.mrb[0].mxu0 %v1590
      %v1963 = vpop.f32.mrb[0].mxu0
      %v1964 = vadd.f32 %v1164, %v1963
      %v1965 = vpop.f32.mrb[0].mxu0
      %v1966 = vadd.f32 %v1164, %v1965
      %v1967 = vpop.f32.mrb[0].mxu0
      %v1968 = vadd.f32 %v1169, %v1967
      %v1969 = vpop.f32.mrb[0].mxu0
      %v1970 = vadd.f32 %v1169, %v1969
      %1971 = vmatprep.mubr.bf16.mxu0 0
      %1972 = vmatmul.mubr.bf16.gmra.mrb[0].mxu0 %v1591
      %v1973 = vpop.f32.mrb[0].mxu0
      %v1974 = vadd.f32 %v1174, %v1973
      %v1975 = vpop.f32.mrb[0].mxu0
      %v1976 = vadd.f32 %v1174, %v1975
      %v1977 = vpop.f32.mrb[0].mxu0
      %v1978 = vadd.f32 %v1179, %v1977
      %v1979 = vpop.f32.mrb[0].mxu0
      %v1980 = vadd.f32 %v1179, %v1979
      %1981 = vmatprep.mubr.bf16.mxu0 0
      %1982 = vmatmul.mubr.bf16.gmra.mrb[0].mxu0 %v1592
      %v1983 = vpop.f32.mrb[0].mxu0
      %v1984 = vadd.f32 %v1184, %v1983
      %v1985 = vpop.f32.mrb[0].mxu0
      %v1986 = vadd.f32 %v1184, %v1985
      %v1987 = vpop.f32.mrb[0].mxu0
      %v1988 = vadd.f32 %v1189, %v1987
      %v1989 = vpop.f32.mrb[0].mxu0
      %v1990 = vadd.f32 %v1189, %v1989
      %1991 = vmatprep.mubr.bf16.mxu0 0
      %1992 = vmatmul.mubr.bf16.gmra.mrb[0].mxu0 %v1593
      %v1993 = vpop.f32.mrb[0].mxu0
      %v1994 = vadd.f32 %v1194, %v1993
      %v1995 = vpop.f32.mrb[0].mxu0
      %v1996 = vadd.f32 %v1194, %v1995
      %v1997 = vpop.f32.mrb[0].mxu0
      %v1998 = vadd.f32 %v1199, %v1997
      %v1999 = vpop.f32.mrb[0].mxu0
      %v2000 = vadd.f32 %v1199, %v1999
      %2001 = vmatprep.mubr.bf16.mxu0 0
      %2002 = vmatmul.mubr.bf16.gmra.mrb[0].mxu0 %v1594
      %v2003 = vpop.f32.mrb[0].mxu0
      %v2004 = vadd.f32 %v1204, %v2003
      %v2005 = vpop.f32.mrb[0].mxu0
      %v2006 = vadd.f32 %v1204, %v2005
      %v2007 = vpop.f32.mrb[0].mxu0
      %v2008 = vadd.f32 %v1209, %v2007
      %v2009 = vpop.f32.mrb[0].mxu0
      %v2010 = vadd.f32 %v1209, %v2009
      %2011 = vmatprep.mubr.bf16.mxu0 0
      %2012 = vmatmul.mubr.bf16.gmra.mrb[0].mxu0 %v1595
      %v2013 = vpop.f32.mrb[0].mxu0
      %v2014 = vadd.f32 %v1214, %v2013
      %v2015 = vpop.f32.mrb[0].mxu0
      %v2016 = vadd.f32 %v1214, %v2015
      %v2017 = vpop.f32.mrb[0].mxu0
      %v2018 = vadd.f32 %v1219, %v2017
      %v2019 = vpop.f32.mrb[0].mxu0
      %v2020 = vadd.f32 %v1219, %v2019
      %2021 = vmatprep.mubr.bf16.mxu0 0
      %2022 = vmatmul.mubr.bf16.gmra.mrb[0].mxu0 %v1596
      %v2023 = vpop.f32.mrb[0].mxu0
      %v2024 = vadd.f32 %v1224, %v2023
      %v2025 = vpop.f32.mrb[0].mxu0
      %v2026 = vadd.f32 %v1224, %v2025
      %v2027 = vpop.f32.mrb[0].mxu0
      %v2028 = vadd.f32 %v1229, %v2027
      %v2029 = vpop.f32.mrb[0].mxu0
      %v2030 = vadd.f32 %v1229, %v2029
      %2031 = vmatprep.mubr.bf16.mxu0 0
      %2032 = vmatmul.mubr.bf16.gmra.mrb[0].mxu0 %v1597
      %v2033 = vpop.f32.mrb[0].mxu0
      %v2034 = vadd.f32 %v1234, %v2033
      %v2035 = vpop.f32.mrb[0].mxu0
      %v2036 = vadd.f32 %v1234, %v2035
      %v2037 = vpop.f32.mrb[0].mxu0
      %v2038 = vadd.f32 %v1239, %v2037
      %v2039 = vpop.f32.mrb[0].mxu0
      %v2040 = vadd.f32 %v1239, %v2039
      %2041 = vmatprep.mubr.bf16.mxu0 0
      %2042 = vmatmul.mubr.bf16.gmra.mrb[0].mxu0 %v1598
      %v2043 = vpop.f32.mrb[0].mxu0
      %v2044 = vadd.f32 %v1244, %v2043
      %v2045 = vpop.f32.mrb[0].mxu0
      %v2046 = vadd.f32 %v1244, %v2045
      %v2047 = vpop.f32.mrb[0].mxu0
      %v2048 = vadd.f32 %v1249, %v2047
      %v2049 = vpop.f32.mrb[0].mxu0
      %v2050 = vadd.f32 %v1249, %v2049
      %2051 = vmatprep.mubr.bf16.mxu0 0
      %2052 = vmatmul.mubr.bf16.gmra.mrb[0].mxu0 %v1599
      %v2053 = vpop.f32.mrb[0].mxu0
      %v2054 = vadd.f32 %v1254, %v2053
      %v2055 = vpop.f32.mrb[0].mxu0
      %v2056 = vadd.f32 %v1254, %v2055
      %v2057 = vpop.f32.mrb[0].mxu0
      %v2058 = vadd.f32 %v1259, %v2057
      %v2059 = vpop.f32.mrb[0].mxu0
      %v2060 = vadd.f32 %v1259, %v2059
      %2061 = vmatprep.mubr.bf16.mxu0 0
      %2062 = vmatmul.mubr.bf16.gmra.mrb[0].mxu0 %v1600
      %v2063 = vpop.f32.mrb[0].mxu0
      %v2064 = vadd.f32 %v1264, %v2063
      %v2065 = vpop.f32.mrb[0].mxu0
      %v2066 = vadd.f32 %v1264, %v2065
      %v2067 = vpop.f32.mrb[0].mxu0
      %v2068 = vadd.f32 %v1269, %v2067
      %v2069 = vpop.f32.mrb[0].mxu0
      %v2070 = vadd.f32 %v1269, %v2069
      %2071 = vmatprep.mubr.bf16.mxu0 0
      %2072 = vmatmul.mubr.bf16.gmra.mrb[0].mxu0 %v1601
      %v2073 = vpop.f32.mrb[0].mxu0
      %v2074 = vadd.f32 %v1274, %v2073
      %v2075 = vpop.f32.mrb[0].mxu0
      %v2076 = vadd.f32 %v1274, %v2075
      %v2077 = vpop.f32.mrb[0].mxu0
      %v2078 = vadd.f32 %v1279, %v2077
      %v2079 = vpop.f32.mrb[0].mxu0
      %v2080 = vadd.f32 %v1279, %v2079
      %2081 = vmatprep.mubr.bf16.mxu0 0
      %2082 = vmatmul.mubr.bf16.gmra.mrb[0].mxu0 %v1602
      %v2083 = vpop.f32.mrb[0].mxu0
      %v2084 = vadd.f32 %v1284, %v2083
      %v2085 = vpop.f32.mrb[0].mxu0
      %v2086 = vadd.f32 %v1284, %v2085
      %v2087 = vpop.f32.mrb[0].mxu0
      %v2088 = vadd.f32 %v1289, %v2087
      %v2089 = vpop.f32.mrb[0].mxu0
      %v2090 = vadd.f32 %v1289, %v2089
      %2091 = vmatprep.mubr.bf16.mxu0 0
      %2092 = vmatmul.mubr.bf16.gmra.mrb[0].mxu0 %v1603
      %v2093 = vpop.f32.mrb[0].mxu0
      %v2094 = vadd.f32 %v1294, %v2093
      %v2095 = vpop.f32.mrb[0].mxu0
      %v2096 = vadd.f32 %v1294, %v2095
      %v2097 = vpop.f32.mrb[0].mxu0
      %v2098 = vadd.f32 %v1299, %v2097
      %v2099 = vpop.f32.mrb[0].mxu0
      %v2100 = vadd.f32 %v1299, %v2099
      %2101 = vmatprep.mubr.bf16.mxu0 0
      %2102 = vmatmul.mubr.bf16.gmra.mrb[0].mxu0 %v1604
      %v2103 = vpop.f32.mrb[0].mxu0
      %v2104 = vadd.f32 %v1304, %v2103
      %v2105 = vpop.f32.mrb[0].mxu0
      %v2106 = vadd.f32 %v1304, %v2105
      %v2107 = vpop.f32.mrb[0].mxu0
      %v2108 = vadd.f32 %v1309, %v2107
      %v2109 = vpop.f32.mrb[0].mxu0
      %v2110 = vadd.f32 %v1309, %v2109
      %2111 = vmatprep.mubr.bf16.mxu0 0
      %2112 = vmatmul.mubr.bf16.gmra.mrb[0].mxu0 %v1605
      %v2113 = vpop.f32.mrb[0].mxu0
      %v2114 = vadd.f32 %v1314, %v2113
      %v2115 = vpop.f32.mrb[0].mxu0
      %v2116 = vadd.f32 %v1314, %v2115
      %v2117 = vpop.f32.mrb[0].mxu0
      %v2118 = vadd.f32 %v1319, %v2117
      %v2119 = vpop.f32.mrb[0].mxu0
      %v2120 = vadd.f32 %v1319, %v2119
      %2121 = vmatprep.mubr.bf16.mxu0 0
      %2122 = vmatmul.mubr.bf16.gmra.mrb[0].mxu0 %v1606
      %v2123 = vpop.f32.mrb[0].mxu0
      %v2124 = vadd.f32 %v1324, %v2123
      %v2125 = vpop.f32.mrb[0].mxu0
      %v2126 = vadd.f32 %v1324, %v2125
      %v2127 = vpop.f32.mrb[0].mxu0
      %v2128 = vadd.f32 %v1329, %v2127
      %v2129 = vpop.f32.mrb[0].mxu0
      %v2130 = vadd.f32 %v1329, %v2129
      %2131 = vmatprep.mubr.bf16.mxu0 0
      %2132 = vmatmul.mubr.bf16.gmra.mrb[0].mxu0 %v1607
      %v2133 = vpop.f32.mrb[0].mxu0
      %v2134 = vadd.f32 %v1334, %v2133
      %v2135 = vpop.f32.mrb[0].mxu0
      %v2136 = vadd.f32 %v1334, %v2135
      %v2137 = vpop.f32.mrb[0].mxu0
      %v2138 = vadd.f32 %v1339, %v2137
      %v2139 = vpop.f32.mrb[0].mxu0
      %v2140 = vadd.f32 %v1339, %v2139
      %2141 = vmatprep.mubr.bf16.mxu0 0
      %2142 = vmatmul.mubr.bf16.gmra.mrb[0].mxu0 %v1608
      %v2143 = vpop.f32.mrb[0].mxu0
      %v2144 = vadd.f32 %v1344, %v2143
      %v2145 = vpop.f32.mrb[0].mxu0
      %v2146 = vadd.f32 %v1344, %v2145
      %v2147 = vpop.f32.mrb[0].mxu0
      %v2148 = vadd.f32 %v1349, %v2147
      %v2149 = vpop.f32.mrb[0].mxu0
      %v2150 = vadd.f32 %v1349, %v2149
      %2151 = vmatprep.mubr.bf16.mxu0 0
      %2152 = vmatmul.mubr.bf16.gmra.mrb[0].mxu0 %v1609
      %v2153 = vpop.f32.mrb[0].mxu0
      %v2154 = vadd.f32 %v1354, %v2153
      %v2155 = vpop.f32.mrb[0].mxu0
      %v2156 = vadd.f32 %v1354, %v2155
      %v2157 = vpop.f32.mrb[0].mxu0
      %v2158 = vadd.f32 %v1359, %v2157
      %v2159 = vpop.f32.mrb[0].mxu0
      %v2160 = vadd.f32 %v1359, %v2159
      %2161 = vmatprep.mubr.bf16.mxu0 0
      %2162 = vmatmul.mubr.bf16.gmra.mrb[0].mxu0 %v1610
      %v2163 = vpop.f32.mrb[0].mxu0
      %v2164 = vadd.f32 %v1364, %v2163
      %v2165 = vpop.f32.mrb[0].mxu0
      %v2166 = vadd.f32 %v1364, %v2165
      %v2167 = vpop.f32.mrb[0].mxu0
      %v2168 = vadd.f32 %v1369, %v2167
      %v2169 = vpop.f32.mrb[0].mxu0
      %v2170 = vadd.f32 %v1369, %v2169
      %2171 = vdwg.mxu0
      %v2172 = vpack.c.bf16 %v1698, %v1694
      %v2173 = vpack.c.bf16 %v1700, %v1696
      %v2174 = vpack.c.bf16 %v1708, %v1704
      %v2175 = vpack.c.bf16 %v1710, %v1706
      %v2176 = vpack.c.bf16 %v1718, %v1714
      %v2177 = vpack.c.bf16 %v1720, %v1716
      %v2178 = vpack.c.bf16 %v1728, %v1724
      %v2179 = vpack.c.bf16 %v1730, %v1726
      %v2180 = vpack.c.bf16 %v1738, %v1734
      %v2181 = vpack.c.bf16 %v1740, %v1736
      %v2182 = vpack.c.bf16 %v1748, %v1744
      %v2183 = vpack.c.bf16 %v1750, %v1746
      %v2184 = vpack.c.bf16 %v1758, %v1754
      %v2185 = vpack.c.bf16 %v1760, %v1756
      %v2186 = vpack.c.bf16 %v1768, %v1764
      %v2187 = vpack.c.bf16 %v1770, %v1766
      %v2188 = vpack.c.bf16 %v1778, %v1774
      %v2189 = vpack.c.bf16 %v1780, %v1776
      %v2190 = vpack.c.bf16 %v1788, %v1784
      %v2191 = vpack.c.bf16 %v1790, %v1786
      %v2192 = vpack.c.bf16 %v1798, %v1794
      %v2193 = vpack.c.bf16 %v1800, %v1796
      %v2194 = vpack.c.bf16 %v1808, %v1804
      %v2195 = vpack.c.bf16 %v1810, %v1806
      %v2196 = vpack.c.bf16 %v1818, %v1814
      %v2197 = vpack.c.bf16 %v1820, %v1816
      %v2198 = vpack.c.bf16 %v1828, %v1824
      %v2199 = vpack.c.bf16 %v1830, %v1826
      %v2200 = vpack.c.bf16 %v1838, %v1834
      %v2201 = vpack.c.bf16 %v1840, %v1836
      %v2202 = vpack.c.bf16 %v1848, %v1844
      %v2203 = vpack.c.bf16 %v1850, %v1846
      %v2204 = vpack.c.bf16 %v1858, %v1854
      %v2205 = vpack.c.bf16 %v1860, %v1856
      %v2206 = vpack.c.bf16 %v1868, %v1864
      %v2207 = vpack.c.bf16 %v1870, %v1866
      %v2208 = vpack.c.bf16 %v1878, %v1874
      %v2209 = vpack.c.bf16 %v1880, %v1876
      %v2210 = vpack.c.bf16 %v1888, %v1884
      %v2211 = vpack.c.bf16 %v1890, %v1886
      %v2212 = vpack.c.bf16 %v1898, %v1894
      %v2213 = vpack.c.bf16 %v1900, %v1896
      %v2214 = vpack.c.bf16 %v1908, %v1904
      %v2215 = vpack.c.bf16 %v1910, %v1906
      %v2216 = vpack.c.bf16 %v1918, %v1914
      %v2217 = vpack.c.bf16 %v1920, %v1916
      %v2218 = vpack.c.bf16 %v1928, %v1924
      %v2219 = vpack.c.bf16 %v1930, %v1926
      %v2220 = vpack.c.bf16 %v1938, %v1934
      %v2221 = vpack.c.bf16 %v1940, %v1936
      %v2222 = vpack.c.bf16 %v1948, %v1944
      %v2223 = vpack.c.bf16 %v1950, %v1946
      %v2224 = vpack.c.bf16 %v1958, %v1954
      %v2225 = vpack.c.bf16 %v1960, %v1956
      %v2226 = vpack.c.bf16 %v1968, %v1964
      %v2227 = vpack.c.bf16 %v1970, %v1966
      %v2228 = vpack.c.bf16 %v1978, %v1974
      %v2229 = vpack.c.bf16 %v1980, %v1976
      %v2230 = vpack.c.bf16 %v1988, %v1984
      %v2231 = vpack.c.bf16 %v1990, %v1986
      %v2232 = vpack.c.bf16 %v1998, %v1994
      %v2233 = vpack.c.bf16 %v2000, %v1996
      %v2234 = vpack.c.bf16 %v2008, %v2004
      %v2235 = vpack.c.bf16 %v2010, %v2006
      %v2236 = vpack.c.bf16 %v2018, %v2014
      %v2237 = vpack.c.bf16 %v2020, %v2016
      %v2238 = vpack.c.bf16 %v2028, %v2024
      %v2239 = vpack.c.bf16 %v2030, %v2026
      %v2240 = vpack.c.bf16 %v2038, %v2034
      %v2241 = vpack.c.bf16 %v2040, %v2036
      %v2242 = vpack.c.bf16 %v2048, %v2044
      %v2243 = vpack.c.bf16 %v2050, %v2046
      %v2244 = vpack.c.bf16 %v2058, %v2054
      %v2245 = vpack.c.bf16 %v2060, %v2056
      %v2246 = vpack.c.bf16 %v2068, %v2064
      %v2247 = vpack.c.bf16 %v2070, %v2066
      %v2248 = vpack.c.bf16 %v2078, %v2074
      %v2249 = vpack.c.bf16 %v2080, %v2076
      %v2250 = vpack.c.bf16 %v2088, %v2084
      %v2251 = vpack.c.bf16 %v2090, %v2086
      %v2252 = vpack.c.bf16 %v2098, %v2094
      %v2253 = vpack.c.bf16 %v2100, %v2096
      %v2254 = vpack.c.bf16 %v2108, %v2104
      %v2255 = vpack.c.bf16 %v2110, %v2106
      %v2256 = vpack.c.bf16 %v2118, %v2114
      %v2257 = vpack.c.bf16 %v2120, %v2116
      %v2258 = vpack.c.bf16 %v2128, %v2124
      %v2259 = vpack.c.bf16 %v2130, %v2126
      %v2260 = vpack.c.bf16 %v2138, %v2134
      %v2261 = vpack.c.bf16 %v2140, %v2136
      %v2262 = vpack.c.bf16 %v2148, %v2144
      %v2263 = vpack.c.bf16 %v2150, %v2146
      %v2264 = vpack.c.bf16 %v2158, %v2154
      %v2265 = vpack.c.bf16 %v2160, %v2156
      %v2266 = vpack.c.bf16 %v2168, %v2164
      %v2267 = vpack.c.bf16 %v2170, %v2166
      %v2268 = vtanh.bf16.pop %v2172
      %v2269 = vtanh.bf16.pop %v2173
      %v2270 = vtanh.bf16.pop %v2174
      %v2271 = vtanh.bf16.pop %v2175
      %v2272 = vtanh.bf16.pop %v2176
      %v2273 = vtanh.bf16.pop %v2177
      %v2274 = vtanh.bf16.pop %v2178
      %v2275 = vtanh.bf16.pop %v2179
      %v2276 = vtanh.bf16.pop %v2180
      %v2277 = vtanh.bf16.pop %v2181
      %v2278 = vtanh.bf16.pop %v2182
      %v2279 = vtanh.bf16.pop %v2183
      %v2280 = vtanh.bf16.pop %v2184
      %v2281 = vtanh.bf16.pop %v2185
      %v2282 = vtanh.bf16.pop %v2186
      %v2283 = vtanh.bf16.pop %v2187
      %v2284 = vtanh.bf16.pop %v2188
      %v2285 = vtanh.bf16.pop %v2189
      %v2286 = vtanh.bf16.pop %v2190
      %v2287 = vtanh.bf16.pop %v2191
      %v2288 = vtanh.bf16.pop %v2192
      %v2289 = vtanh.bf16.pop %v2193
      %v2290 = vtanh.bf16.pop %v2194
      %v2291 = vtanh.bf16.pop %v2195
      %v2292 = vtanh.bf16.pop %v2196
      %v2293 = vtanh.bf16.pop %v2197
      %v2294 = vtanh.bf16.pop %v2198
      %v2295 = vtanh.bf16.pop %v2199
      %v2296 = vtanh.bf16.pop %v2200
      %v2297 = vtanh.bf16.pop %v2201
      %v2298 = vtanh.bf16.pop %v2202
      %v2299 = vtanh.bf16.pop %v2203
      %v2300 = vtanh.bf16.pop %v2204
      %v2301 = vtanh.bf16.pop %v2205
      %v2302 = vtanh.bf16.pop %v2206
      %v2303 = vtanh.bf16.pop %v2207
      %v2304 = vtanh.bf16.pop %v2208
      %v2305 = vtanh.bf16.pop %v2209
      %v2306 = vtanh.bf16.pop %v2210
      %v2307 = vtanh.bf16.pop %v2211
      %v2308 = vtanh.bf16.pop %v2212
      %v2309 = vtanh.bf16.pop %v2213
      %v2310 = vtanh.bf16.pop %v2214
      %v2311 = vtanh.bf16.pop %v2215
      %v2312 = vtanh.bf16.pop %v2216
      %v2313 = vtanh.bf16.pop %v2217
      %v2314 = vtanh.bf16.pop %v2218
      %v2315 = vtanh.bf16.pop %v2219
      %v2316 = vtanh.bf16.pop %v2220
      %v2317 = vtanh.bf16.pop %v2221
      %v2318 = vtanh.bf16.pop %v2222
      %v2319 = vtanh.bf16.pop %v2223
      %v2320 = vtanh.bf16.pop %v2224
      %v2321 = vtanh.bf16.pop %v2225
      %v2322 = vtanh.bf16.pop %v2226
      %v2323 = vtanh.bf16.pop %v2227
      %v2324 = vtanh.bf16.pop %v2228
      %v2325 = vtanh.bf16.pop %v2229
      %v2326 = vtanh.bf16.pop %v2230
      %v2327 = vtanh.bf16.pop %v2231
      %v2328 = vtanh.bf16.pop %v2232
      %v2329 = vtanh.bf16.pop %v2233
      %v2330 = vtanh.bf16.pop %v2234
      %v2331 = vtanh.bf16.pop %v2235
      %v2332 = vtanh.bf16.pop %v2236
      %v2333 = vtanh.bf16.pop %v2237
      %v2334 = vtanh.bf16.pop %v2238
      %v2335 = vtanh.bf16.pop %v2239
      %v2336 = vtanh.bf16.pop %v2240
      %v2337 = vtanh.bf16.pop %v2241
      %v2338 = vtanh.bf16.pop %v2242
      %v2339 = vtanh.bf16.pop %v2243
      %v2340 = vtanh.bf16.pop %v2244
      %v2341 = vtanh.bf16.pop %v2245
      %v2342 = vtanh.bf16.pop %v2246
      %v2343 = vtanh.bf16.pop %v2247
      %v2344 = vtanh.bf16.pop %v2248
      %v2345 = vtanh.bf16.pop %v2249
      %v2346 = vtanh.bf16.pop %v2250
      %v2347 = vtanh.bf16.pop %v2251
      %v2348 = vtanh.bf16.pop %v2252
      %v2349 = vtanh.bf16.pop %v2253
      %v2350 = vtanh.bf16.pop %v2254
      %v2351 = vtanh.bf16.pop %v2255
      %v2352 = vtanh.bf16.pop %v2256
      %v2353 = vtanh.bf16.pop %v2257
      %v2354 = vtanh.bf16.pop %v2258
      %v2355 = vtanh.bf16.pop %v2259
      %v2356 = vtanh.bf16.pop %v2260
      %v2357 = vtanh.bf16.pop %v2261
      %v2358 = vtanh.bf16.pop %v2262
      %v2359 = vtanh.bf16.pop %v2263
      %v2360 = vtanh.bf16.pop %v2264
      %v2361 = vtanh.bf16.pop %v2265
      %v2362 = vtanh.bf16.pop %v2266
      %v2363 = vtanh.bf16.pop %v2267
      %v2364 = vld [vmem:[%s5] sm:$0xff]
      %v2365 = vld [vmem:[%s5 + $0x8] sm:$0xff]
      %v2366 = vld [vmem:[%s5 + $0x10] sm:$0xff]
      %v2367 = vld [vmem:[%s5 + $0x18] sm:$0x11]
      %v2368 = vld [vmem:[%s5 + $0x20] sm:$0x11]
      %v2369 = vld [vmem:[%s5 + $0x28] sm:$0x11]
      %v2370 = vld [vmem:[%s6] sm:$0xff]
      %v2371 = vld [vmem:[%s6 + $0x8] sm:$0x3]
      %2373 = vset.pattern.permute.xlu0 0
      %2374 = vperm.xlu0 %2373, %v2370
      %v2375 = vpop.permute.xlu0 %2374
      %2378 = vset.pattern.permute.xlu0 0
      %2379 = vperm.xlu0 %2378, %v2371
      %v2380 = vpop.permute.xlu0 %2379
      %v2388 = vunpack.c.l.b16 %v2364
      %v2389 = vunpack.c.h.b16 %v2364
      %v2390 = vunpack.c.l.b16 %v2365
      %v2391 = vunpack.c.h.b16 %v2365
      %v2392 = vunpack.c.l.b16 %v2366
      %v2393 = vunpack.c.h.b16 %v2366
      %v2394 = vunpack.c.l.b16 %v2367
      %v2395 = vunpack.c.h.b16 %v2367
      %v2396 = vunpack.c.l.b16 %v2368
      %v2397 = vunpack.c.h.b16 %v2368
      %v2398 = vunpack.c.l.b16 %v2369
      %v2399 = vunpack.c.h.b16 %v2369
      %v2400 = vpack.c.b16 %v2394, %v2388
      %v2401 = vpack.c.b16 %v2395, %v2389
      %v2402 = vpack.c.b16 %v2396, %v2390
      %v2403 = vpack.c.b16 %v2397, %v2391
      %v2404 = vpack.c.b16 %v2398, %v2392
      %v2405 = vpack.c.b16 %v2399, %v2393
      %2412 = vmatprep.subr.bf16.mxu0 %v2269
      %2413 = vmatpush1.bf16.msra.mxu0 %v2268
      %2414 = vmatprep.subr.bf16.mxu0 %v2271
      %2415 = vmatpush1.bf16.msra.mxu0 %v2270
      %2416 = vmatprep.subr.bf16.mxu0 %v2273
      %2417 = vmatpush1.bf16.msra.mxu0 %v2272
      %2418 = vmatprep.subr.bf16.mxu0 %v2275
      %2419 = vmatpush1.bf16.msra.mxu0 %v2274
      %2420 = vmatprep.subr.bf16.mxu0 %v2277
      %2421 = vmatpush1.bf16.msra.mxu0 %v2276
      %2422 = vmatprep.subr.bf16.mxu0 %v2279
      %2423 = vmatpush1.bf16.msra.mxu0 %v2278
      %2424 = vmatprep.subr.bf16.mxu0 %v2281
      %2425 = vmatpush1.bf16.msra.mxu0 %v2280
      %2426 = vmatprep.subr.bf16.mxu0 %v2283
      %2427 = vmatpush1.bf16.msra.mxu0 %v2282
      %2428 = vmatprep.subr.bf16.mxu0 %v2285
      %2429 = vmatpush1.bf16.msra.mxu0 %v2284
      %2430 = vmatprep.subr.bf16.mxu0 %v2287
      %2431 = vmatpush1.bf16.msra.mxu0 %v2286
      %2432 = vmatprep.subr.bf16.mxu0 %v2289
      %2433 = vmatpush1.bf16.msra.mxu0 %v2288
      %2434 = vmatprep.subr.bf16.mxu0 %v2291
      %2435 = vmatpush1.bf16.msra.mxu0 %v2290
      %2436 = vmatprep.subr.bf16.mxu0 %v2293
      %2437 = vmatpush1.bf16.msra.mxu0 %v2292
      %2438 = vmatprep.subr.bf16.mxu0 %v2295
      %2439 = vmatpush1.bf16.msra.mxu0 %v2294
      %2440 = vmatprep.subr.bf16.mxu0 %v2297
      %2441 = vmatpush1.bf16.msra.mxu0 %v2296
      %2442 = vmatprep.subr.bf16.mxu0 %v2299
      %2443 = vmatpush1.bf16.msra.mxu0 %v2298
      %2444 = vmatprep.mubr.bf16.mxu0 %v2401
      %2445 = vmatmul.mubr.bf16.gmra.mrb[0].mxu0 %v2400
      %v2446 = vpop.f32.mrb[0].mxu0
      %v2447 = vadd.f32 %v2375, %v2446
      %v2448 = vpop.f32.mrb[0].mxu0
      %v2449 = vadd.f32 %v2375, %v2448
      %v2450 = vpop.f32.mrb[0].mxu0
      %v2451 = vadd.f32 %v2380, %v2450
      %v2452 = vpop.f32.mrb[0].mxu0
      %v2453 = vadd.f32 %v2380, %v2452
      %2454 = vdwg.mxu0
      %2455 = vmatprep.subr.bf16.mxu0 %v2301
      %2456 = vmatpush1.bf16.msra.mxu0 %v2300
      %2457 = vmatprep.subr.bf16.mxu0 %v2303
      %2458 = vmatpush1.bf16.msra.mxu0 %v2302
      %2459 = vmatprep.subr.bf16.mxu0 %v2305
      %2460 = vmatpush1.bf16.msra.mxu0 %v2304
      %2461 = vmatprep.subr.bf16.mxu0 %v2307
      %2462 = vmatpush1.bf16.msra.mxu0 %v2306
      %2463 = vmatprep.subr.bf16.mxu0 %v2309
      %2464 = vmatpush1.bf16.msra.mxu0 %v2308
      %2465 = vmatprep.subr.bf16.mxu0 %v2311
      %2466 = vmatpush1.bf16.msra.mxu0 %v2310
      %2467 = vmatprep.subr.bf16.mxu0 %v2313
      %2468 = vmatpush1.bf16.msra.mxu0 %v2312
      %2469 = vmatprep.subr.bf16.mxu0 %v2315
      %2470 = vmatpush1.bf16.msra.mxu0 %v2314
      %2471 = vmatprep.subr.bf16.mxu0 %v2317
      %2472 = vmatpush1.bf16.msra.mxu0 %v2316
      %2473 = vmatprep.subr.bf16.mxu0 %v2319
      %2474 = vmatpush1.bf16.msra.mxu0 %v2318
      %2475 = vmatprep.subr.bf16.mxu0 %v2321
      %2476 = vmatpush1.bf16.msra.mxu0 %v2320
      %2477 = vmatprep.subr.bf16.mxu0 %v2323
      %2478 = vmatpush1.bf16.msra.mxu0 %v2322
      %2479 = vmatprep.subr.bf16.mxu0 %v2325
      %2480 = vmatpush1.bf16.msra.mxu0 %v2324
      %2481 = vmatprep.subr.bf16.mxu0 %v2327
      %2482 = vmatpush1.bf16.msra.mxu0 %v2326
      %2483 = vmatprep.subr.bf16.mxu0 %v2329
      %2484 = vmatpush1.bf16.msra.mxu0 %v2328
      %2485 = vmatprep.subr.bf16.mxu0 %v2331
      %2486 = vmatpush1.bf16.msra.mxu0 %v2330
      %2487 = vmatprep.mubr.bf16.mxu0 %v2403
      %2488 = vmatmul.mubr.bf16.gmra.mrb[0].mxu0 %v2402
      %v2489 = vpop.f32.mrb[0].mxu0
      %v2490 = vadd.f32 %v2447, %v2489
      %v2491 = vpop.f32.mrb[0].mxu0
      %v2492 = vadd.f32 %v2449, %v2491
      %v2493 = vpop.f32.mrb[0].mxu0
      %v2494 = vadd.f32 %v2451, %v2493
      %v2495 = vpop.f32.mrb[0].mxu0
      %v2496 = vadd.f32 %v2453, %v2495
      %2497 = vdwg.mxu0
      %2498 = vmatprep.subr.bf16.mxu0 %v2333
      %2499 = vmatpush1.bf16.msra.mxu0 %v2332
      %2500 = vmatprep.subr.bf16.mxu0 %v2335
      %2501 = vmatpush1.bf16.msra.mxu0 %v2334
      %2502 = vmatprep.subr.bf16.mxu0 %v2337
      %2503 = vmatpush1.bf16.msra.mxu0 %v2336
      %2504 = vmatprep.subr.bf16.mxu0 %v2339
      %2505 = vmatpush1.bf16.msra.mxu0 %v2338
      %2506 = vmatprep.subr.bf16.mxu0 %v2341
      %2507 = vmatpush1.bf16.msra.mxu0 %v2340
      %2508 = vmatprep.subr.bf16.mxu0 %v2343
      %2509 = vmatpush1.bf16.msra.mxu0 %v2342
      %2510 = vmatprep.subr.bf16.mxu0 %v2345
      %2511 = vmatpush1.bf16.msra.mxu0 %v2344
      %2512 = vmatprep.subr.bf16.mxu0 %v2347
      %2513 = vmatpush1.bf16.msra.mxu0 %v2346
      %2514 = vmatprep.subr.bf16.mxu0 %v2349
      %2515 = vmatpush1.bf16.msra.mxu0 %v2348
      %2516 = vmatprep.subr.bf16.mxu0 %v2351
      %2517 = vmatpush1.bf16.msra.mxu0 %v2350
      %2518 = vmatprep.subr.bf16.mxu0 %v2353
      %2519 = vmatpush1.bf16.msra.mxu0 %v2352
      %2520 = vmatprep.subr.bf16.mxu0 %v2355
      %2521 = vmatpush1.bf16.msra.mxu0 %v2354
      %2522 = vmatprep.subr.bf16.mxu0 %v2357
      %2523 = vmatpush1.bf16.msra.mxu0 %v2356
      %2524 = vmatprep.subr.bf16.mxu0 %v2359
      %2525 = vmatpush1.bf16.msra.mxu0 %v2358
      %2526 = vmatprep.subr.bf16.mxu0 %v2361
      %2527 = vmatpush1.bf16.msra.mxu0 %v2360
      %2528 = vmatprep.subr.bf16.mxu0 %v2363
      %2529 = vmatpush1.bf16.msra.mxu0 %v2362
      %2530 = vmatprep.mubr.bf16.mxu0 %v2405
      %2531 = vmatmul.mubr.bf16.gmra.mrb[0].mxu0 %v2404
      %v2532 = vpop.f32.mrb[0].mxu0
      %v2533 = vadd.f32 %v2490, %v2532
      %v2534 = vpop.f32.mrb[0].mxu0
      %v2535 = vadd.f32 %v2492, %v2534
      %v2536 = vpop.f32.mrb[0].mxu0
      %v2537 = vadd.f32 %v2494, %v2536
      %v2538 = vpop.f32.mrb[0].mxu0
      %v2539 = vadd.f32 %v2496, %v2538
      %2540 = vdwg.mxu0
      %v2541 = vtanh.pop %v2533
      %v2542 = vtanh.pop %v2535
      %v2543 = vtanh.pop %v2537
      %v2544 = vtanh.pop %v2539
      %v2545 = vld [vmem:[%s7] sm:$0x1]
      %v2546 = vld [vmem:[#allocation2] sm:$0x1]
      %2548 = vset.pattern.permute.xlu0 0
      %2549 = vperm.xlu0 %2548, %v2546
      %v2550 = vpop.permute.xlu0 %2549
      %v2552 = vlaneseq
      %v2553 = vshrl.u32 %v2552, 7
      %v2554 = vsub.s32 0, %v2553
      %v2555 = vrot.slane %v2550, %v2554
      %vm2556 = vcmask 80896
      %v2558 = vsel %vm2556, %v2545, 0
      %vm2560 = vcmask 1041408
      %v2562 = vsel %vm2560, %v2543, 0
      %v2565 = vsel %vm2560, %v2544, 0
      %2567 = vmatprep.subr.mxu0 %v2542
      %2568 = vmatpush1.msra.mxu0 %v2541
      %2569 = vmatprep.subr.mxu0 %v2565
      %2570 = vmatpush1.msra.mxu0 %v2562
      %2571 = vmatprep.subr.mxu0 0.0
      %2572 = vmatpush1.msra.mxu0 0.0
      %2573 = vmatprep.subr.mxu0 0.0
      %2574 = vmatpush1.msra.mxu0 0.0
      %2575 = vmatprep.subr.mxu0 0.0
      %2576 = vmatpush1.msra.mxu0 0.0
      %2577 = vmatprep.subr.mxu0 0.0
      %2578 = vmatpush1.msra.mxu0 0.0
      %2579 = vmatprep.subr.mxu0 0.0
      %2580 = vmatpush1.msra.mxu0 0.0
      %2581 = vmatprep.subr.mxu0 0.0
      %2582 = vmatpush1.msra.mxu0 0.0
      %2583 = vmatprep.subr.mxu0 0.0
      %2584 = vmatpush1.msra.mxu0 0.0
      %2585 = vmatprep.subr.mxu0 0.0
      %2586 = vmatpush1.msra.mxu0 0.0
      %2587 = vmatprep.subr.mxu0 0.0
      %2588 = vmatpush1.msra.mxu0 0.0
      %2589 = vmatprep.subr.mxu0 0.0
      %2590 = vmatpush1.msra.mxu0 0.0
      %2591 = vmatprep.subr.mxu0 0.0
      %2592 = vmatpush1.msra.mxu0 0.0
      %2593 = vmatprep.subr.mxu0 0.0
      %2594 = vmatpush1.msra.mxu0 0.0
      %2595 = vmatprep.subr.mxu0 0.0
      %2596 = vmatpush1.msra.mxu0 0.0
      %2597 = vmatprep.subr.mxu0 0.0
      %2598 = vmatpush1.msra.mxu0 0.0
      %2599 = vmatprep.subr.mxu0 0.0
      %2600 = vmatpush1.msra.mxu0 0.0
      %2601 = vmatprep.subr.mxu0 0.0
      %2602 = vmatpush1.msra.mxu0 0.0
      %2603 = vmatprep.subr.mxu0 0.0
      %2604 = vmatpush1.msra.mxu0 0.0
      %2605 = vmatprep.subr.mxu0 0.0
      %2606 = vmatpush1.msra.mxu0 0.0
      %2607 = vmatprep.subr.mxu0 0.0
      %2608 = vmatpush1.msra.mxu0 0.0
      %2609 = vmatprep.subr.mxu0 0.0
      %2610 = vmatpush1.msra.mxu0 0.0
      %2611 = vmatprep.subr.mxu0 0.0
      %2612 = vmatpush1.msra.mxu0 0.0
      %2613 = vmatprep.subr.mxu0 0.0
      %2614 = vmatpush1.msra.mxu0 0.0
      %2615 = vmatprep.subr.mxu0 0.0
      %2616 = vmatpush1.msra.mxu0 0.0
      %2617 = vmatprep.subr.mxu0 0.0
      %2618 = vmatpush1.msra.mxu0 0.0
      %2619 = vmatprep.subr.mxu0 0.0
      %2620 = vmatpush1.msra.mxu0 0.0
      %2621 = vmatprep.subr.mxu0 0.0
      %2622 = vmatpush1.msra.mxu0 0.0
      %2623 = vmatprep.subr.mxu0 0.0
      %2624 = vmatpush1.msra.mxu0 0.0
      %2625 = vmatprep.subr.mxu0 0.0
      %2626 = vmatpush1.msra.mxu0 0.0
      %2627 = vmatprep.subr.mxu0 0.0
      %2628 = vmatpush1.msra.mxu0 0.0
      %2629 = vmatprep.subr.mxu0 0.0
      %2630 = vmatpush1.msra.mxu0 0.0
      %2631 = vmatprep.mubr.f32.mxu0 0.0
      %2632 = vmatmul.mubr.f32.gmra.mrb[0].mxu0 %v2558
      %v2633 = vpop.f32.mrb[0].mxu0
      %v2634 = vadd.f32 %v2555, %v2633
      %v2635 = vpop.f32.mrb[0].mxu0
      %v2636 = vadd.f32 %v2555, %v2635
      %2637 = vdwg.mxu0
      %v2638 = vtanh.pop %v2634
      %v2639 = vtanh.pop %v2636
      %v2640 = vmul.f32 %v2638, 0.5
      %v2641 = vmul.f32 %v2639, 0.5
      %v2642 = vadd.f32 %v2640, 0.5
      %v2643 = vadd.f32 %v2641, 0.5
      %v2646 = vcombine.low %v2642, %v2643
      %v2648 = vunpack.c.l.s4 1966171168
      %v2649 = vunpack.c.0.s8 %v2648
      %v2650 = vlaneseq
      %v2651 = vshrl.u32 %v2650, 7
      %v2652 = vsub.s32 %v2649, %v2651
      %v2653 = vrot.slane %v2646, %v2652
      %v2655 = vunpack.c.l.s4 1966171168
      %v2656 = vunpack.c.0.s8 %v2655
      %v2657 = vlaneseq
      %v2658 = vshrl.u32 %v2657, 7
      %v2659 = vsub.s32 %v2656, %v2658
      %v2660 = vrot.slane %v2653, %v2659
      %v2662 = vlaneseq
      %vm2663 = vcmp.ge.s32.totalorder %v2662, 0
      %vm2664 = vcmp.lt.s32.totalorder %v2662, 256
      %vm2665 = vmand %vm2663, %vm2664
      %2666 = vst.msk [vmem:[%s334] sm:$0x3] %vm2665, %v2660
      %s2667 = smul.u32 2, %s22
      %p2668 = scmp.lt.s32.totalorder %s2667, 3
      %s2669 = scalar_select %p2668, %s2667, 3
      %s2670 = scalar_lea.vmem %s9, %s2669
      // Predicated region
      $region57: #{xyz_net2_forward.1} parent=55 // pred_check
        %p2671 = pneg %p234
      $region58: #{xyz_net2_forward.1} parent=55 // pred_check_branch
        %2673 = sbr.rel (%p2671) target = $region60
      $region59: #{xyz_net2_forward.1} parent=55 // pred_region
        %s2674 = smul.u32 2, %s22
      $region60: #{xyz_net2_forward.1} parent=55 // pred_fallthru
        _
    $region56: #{xyz_net2_forward.1} parent=5 // pred_fallthru
      _
    %p2675 = scmp.le.s32.totalorder 2, %s17
    // Predicated region
    $region61: #{xyz_net2_forward.1} parent=5 // pred_check
      %p2676 = pneg %p2675
    $region62: #{xyz_net2_forward.1} parent=5 // pred_check_branch
      %2678 = sbr.rel (%p2676) target = $region64
    $region63: #{xyz_net2_forward.1} parent=5 // pred_region
      %s2679 = ssub.s32 %s17, 2
      // Predicated region
      $region65: #{xyz_net2_forward.1} parent=63 // pred_check
        %p2680 = pneg %p240
      $region66: #{xyz_net2_forward.1} parent=63 // pred_check_branch
        %2682 = sbr.rel (%p2680) target = $region68
      $region67: #{xyz_net2_forward.1} parent=63 // pred_region
        %s2683 = smul.u32 2, %s23
        %p2684 = scmp.lt.s32.totalorder %s2683, 3
        %s2685 = scalar_select %p2684, %s2683, 3
        %s2686 = scalar_lea.vmem %s9, %s2685
      $region68: #{xyz_net2_forward.1} parent=63 // pred_fallthru
        _
    $region64: #{xyz_net2_forward.1} parent=5 // pred_fallthru
      _
  $region6: #{xyz_net2_forward.1} parent=0 // loop_footer
    %s21 = sadd.s32 1, %s17
  $region7: #{xyz_net2_forward.1} parent=0 // loop_footer_branch
    %16 = sbr.rel target = $region3
  $region8: #{xyz_net2_forward.1} parent=0 // loop_exit
    _

</llo_original>
